<compile_context>
chip_gen: v7x
topology: tpu7x:2x2x1
jax: 0.10.0
libtpu: 0.0.40
codegen_flags: <defaults>
</compile_context>

<pallas_src>
import numpy as np
import jax
import jax.numpy as jnp
from jax.experimental import pallas as pl
from jax.experimental.pallas import tpu as pltpu

# Problem sizes implied by the module's forward (LazyLinear infers FEAT).
B, CIN, H, W = 2, 3, 16, 16
COUT, K = 3, 3
HC, WC = H - K + 1, W - K + 1          # conv output spatial: 14 x 14
HP, WP = HC - K + 1, WC - K + 1        # maxpool output spatial: 12 x 12
FEAT = COUT * HP * WP                  # 432 (torch.nn.Flatten, channel-major)
OUT = 64

HW = H * W                             # 256: one channel image flattened onto lanes
INW = CIN * HW                         # 768 = 6 x 128: lane-dense input slab width
PADF = COUT * HW                       # 768 = 6 x 128: lane-dense activation slab width
OFFS = tuple(kh * W + kw for kh in range(K) for kw in range(K))   # 9 flat window offsets


def fused_forward_kernel(x_ref, cmat_ref, cbias_ref, lwp_ref, lb_ref, o_ref):
    """Fused conv3x3(valid) + maxpool3x3(stride1) + ReLU + flatten + linear.

    x_ref    : (B, INW)     VMEM  input, channel images flattened onto lanes
    cmat_ref : (INW, PADF)  VMEM  pre-scattered conv weight matrix (zeros elsewhere)
    cbias_ref: (1, PADF)    VMEM  conv bias broadcast over each channel's 256 columns
    lwp_ref  : (PADF, OUT)  VMEM  linear weight scattered to the padded layout
                                  (rows at padding positions are zero)
    lb_ref   : (1, OUT)     VMEM  linear bias
    o_ref    : (B, OUT)     VMEM  output
    """
    # Convolution: one MXU matmul on the lane-dense slab (+ broadcast bias).
    conv = (
        jnp.dot(x_ref[...], cmat_ref[...], preferred_element_type=jnp.float32)
        + cbias_ref[...]
    )                                                               # (B, PADF)

    # 3x3 stride-1 max pool: 8 XLU rolls over the whole slab + running max.
    # Kept pool positions never read across a 256-lane channel boundary (221 < 256);
    # wrapped lanes are finite and masked by lwp's zero rows.
    pooled = conv
    for d in OFFS[1:]:
        pooled = jnp.maximum(pooled, pltpu.roll(conv, PADF - d, axis=1))

    # ReLU; "flatten" is free -- the slab is already lane-dense channel-major.
    act = jnp.maximum(pooled, 0.0)                                  # (B, PADF)

    # Linear layer on the MXU; padded columns hit zero weight rows, bias broadcasts.
    o_ref[...] = (
        jnp.dot(act, lwp_ref[...], preferred_element_type=jnp.float32) + lb_ref[...]
    )


def prepare_params(conv_w, conv_b, lin_w, lin_b):
    """One-time parameter munging, hoisted out of the per-call (jitted) forward."""
    conv_w = np.asarray(conv_w, np.float32)
    conv_b = np.asarray(conv_b, np.float32)
    lin_w = np.asarray(lin_w, np.float32)
    lin_b = np.asarray(lin_b, np.float32)

    # Conv as matmul: column oc*HW + p (p = h*W + w, valid h<HC, w<WC) accumulates
    # x[ic, p + kh*W + kw] * conv_w[oc, ic, kh, kw]; all other entries stay zero.
    cmat = np.zeros((INW, PADF), np.float32)
    hh, ww = np.meshgrid(np.arange(HC), np.arange(WC), indexing="ij")
    p_valid = (hh * W + ww).reshape(-1)                             # (HC*WC,)
    for oc in range(COUT):
        cols = oc * HW + p_valid
        for ic in range(CIN):
            for kh in range(K):
                for kw in range(K):
                    rows = ic * HW + p_valid + kh * W + kw
                    cmat[rows, cols] = conv_w[oc, ic, kh, kw]

    # Per-channel conv bias broadcast across each channel's 256 lane columns.
    cbias = np.repeat(conv_b, HW).reshape(1, PADF).astype(np.float32)

    # Scatter torch-layout (OUT, FEAT) linear weight into the padded (COUT*H*W, OUT)
    # layout used by the kernel (flatten index f = oc*HP*WP + ph*WP + pw maps to padded
    # column j = oc*H*W + ph*W + pw); all other rows stay zero.
    oc, ph, pw = np.meshgrid(np.arange(COUT), np.arange(HP), np.arange(WP), indexing="ij")
    padded_rows = (oc * HW + ph * W + pw).reshape(-1)               # (FEAT,)
    lwp = np.zeros((PADF, OUT), np.float32)
    lwp[padded_rows, :] = lin_w.T                                   # y = x @ W^T + b
    lb2 = lin_b.reshape(1, OUT)

    return (jnp.asarray(cmat), jnp.asarray(cbias), jnp.asarray(lwp), jnp.asarray(lb2))


def rnn_module_forward(x, cmat, cbias, lwp, lb2):
    xf = x.reshape(B, INW)              # contiguous NCHW reshape: free under XLA
    return pl.pallas_call(
        fused_forward_kernel,
        out_shape=jax.ShapeDtypeStruct((B, OUT), jnp.float32),
        in_specs=[
            pl.BlockSpec(memory_space=pltpu.MemorySpace.VMEM),      # input slab
            pl.BlockSpec(memory_space=pltpu.MemorySpace.VMEM),      # conv matrix
            pl.BlockSpec(memory_space=pltpu.MemorySpace.VMEM),      # conv bias slab
            pl.BlockSpec(memory_space=pltpu.MemorySpace.VMEM),      # padded linear weight
            pl.BlockSpec(memory_space=pltpu.MemorySpace.VMEM),      # linear bias
        ],
        out_specs=pl.BlockSpec(memory_space=pltpu.MemorySpace.VMEM),
    )(xf, cmat, cbias, lwp, lb2)


rnn_module_forward_jit = jax.jit(rnn_module_forward)


def reference_forward(x, conv_w, conv_b, lin_w, lin_b):
    """Pure-JAX reference (same math, no Pallas) for a sanity check."""
    conv = jnp.zeros((B, COUT, HC, WC), jnp.float32) + conv_b[None, :, None, None]
    for oc in range(COUT):
        for ic in range(CIN):
            for kh in range(K):
                for kw in range(K):
                    conv = conv.at[:, oc].add(
                        x[:, ic, kh:kh + HC, kw:kw + WC] * conv_w[oc, ic, kh, kw]
                    )
    pooled = conv[:, :, 0:HP, 0:WP]
    for ph in range(K):
        for pw in range(K):
            pooled = jnp.maximum(pooled, conv[:, :, ph:ph + HP, pw:pw + WP])
    relu = jnp.maximum(pooled, 0.0)
    flat = relu.reshape(B, FEAT)
    return flat @ lin_w.T + lin_b[None, :]


if __name__ == "__main__":
    key = jax.random.PRNGKey(0)
    k1, k2, k3, k4, k5 = jax.random.split(key, 5)

    # Deterministic synthetic parameters (shapes from the module's __init__).
    conv_w = jax.random.normal(k1, (COUT, CIN, K, K), jnp.float32) * 0.1
    conv_b = jax.random.normal(k2, (COUT,), jnp.float32) * 0.1
    lin_w = jax.random.normal(k3, (OUT, FEAT), jnp.float32) * 0.05   # torch Linear layout
    lin_b = jax.random.normal(k4, (OUT,), jnp.float32) * 0.05
    x = jax.random.normal(k5, (B, CIN, H, W), jnp.float32)           # NCHW input

    params = prepare_params(conv_w, conv_b, lin_w, lin_b)            # hoisted, done once
    y = rnn_module_forward_jit(x, *params)
    y = jax.block_until_ready(y)

    y_ref = reference_forward(x, conv_w, conv_b, lin_w, lin_b)
    assert y.shape == (B, OUT)
    assert jnp.allclose(y, y_ref, atol=1e-4, rtol=1e-4)

    print("KERNEL_OK")
</pallas_src>

<mosaic_0001>
module attributes {stable_mosaic.version = 11 : i64} {
  func.func @fused_forward_kernel(%arg0: memref<2x768xf32, #tpu.memory_space<vmem>>, %arg1: memref<768x768xf32, #tpu.memory_space<vmem>>, %arg2: memref<1x768xf32, #tpu.memory_space<vmem>>, %arg3: memref<768x64xf32, #tpu.memory_space<vmem>>, %arg4: memref<1x64xf32, #tpu.memory_space<vmem>>, %arg5: memref<2x64xf32, #tpu.memory_space<vmem>>) attributes {dimension_semantics = [], scalar_prefetch = 0 : i64, scratch_operands = 0 : i64, tpu.core_type = #tpu.core_type<tc>} {
    %c0 = arith.constant 0 : index
    %c0_0 = arith.constant 0 : index
    %0 = vector.load %arg0[%c0, %c0_0] : memref<2x768xf32, #tpu.memory_space<vmem>>, vector<2x768xf32>
    %c0_1 = arith.constant 0 : index
    %c0_2 = arith.constant 0 : index
    %1 = vector.load %arg1[%c0_1, %c0_2] : memref<768x768xf32, #tpu.memory_space<vmem>>, vector<768x768xf32>
    %cst = arith.constant dense<0.000000e+00> : vector<2x768xf32>
    %2 = tpu.matmul %0, %1, %cst {dimension_numbers = #tpu.dot_dimension_numbers<[1], [0], [0], [1], [0, 0, 1, 1], [], []>} : vector<2x768xf32>, vector<768x768xf32>, vector<2x768xf32> -> vector<2x768xf32>
    %c0_3 = arith.constant 0 : index
    %c0_4 = arith.constant 0 : index
    %3 = vector.load %arg2[%c0_3, %c0_4] : memref<1x768xf32, #tpu.memory_space<vmem>>, vector<1x768xf32>
    %4 = vector.broadcast %3 : vector<1x768xf32> to vector<2x768xf32>
    %5 = arith.addf %2, %4 : vector<2x768xf32>
    %c767_i32 = arith.constant 767 : i32
    %6 = tpu.dynamic_rotate %5 by %c767_i32 dim 1 : vector<2x768xf32>, i32 -> vector<2x768xf32>
    %7 = arith.maximumf %5, %6 : vector<2x768xf32>
    %c766_i32 = arith.constant 766 : i32
    %8 = tpu.dynamic_rotate %5 by %c766_i32 dim 1 : vector<2x768xf32>, i32 -> vector<2x768xf32>
    %9 = arith.maximumf %7, %8 : vector<2x768xf32>
    %c752_i32 = arith.constant 752 : i32
    %10 = tpu.dynamic_rotate %5 by %c752_i32 dim 1 : vector<2x768xf32>, i32 -> vector<2x768xf32>
    %11 = arith.maximumf %9, %10 : vector<2x768xf32>
    %c751_i32 = arith.constant 751 : i32
    %12 = tpu.dynamic_rotate %5 by %c751_i32 dim 1 : vector<2x768xf32>, i32 -> vector<2x768xf32>
    %13 = arith.maximumf %11, %12 : vector<2x768xf32>
    %c750_i32 = arith.constant 750 : i32
    %14 = tpu.dynamic_rotate %5 by %c750_i32 dim 1 : vector<2x768xf32>, i32 -> vector<2x768xf32>
    %15 = arith.maximumf %13, %14 : vector<2x768xf32>
    %c736_i32 = arith.constant 736 : i32
    %16 = tpu.dynamic_rotate %5 by %c736_i32 dim 1 : vector<2x768xf32>, i32 -> vector<2x768xf32>
    %17 = arith.maximumf %15, %16 : vector<2x768xf32>
    %c735_i32 = arith.constant 735 : i32
    %18 = tpu.dynamic_rotate %5 by %c735_i32 dim 1 : vector<2x768xf32>, i32 -> vector<2x768xf32>
    %19 = arith.maximumf %17, %18 : vector<2x768xf32>
    %c734_i32 = arith.constant 734 : i32
    %20 = tpu.dynamic_rotate %5 by %c734_i32 dim 1 : vector<2x768xf32>, i32 -> vector<2x768xf32>
    %21 = arith.maximumf %19, %20 : vector<2x768xf32>
    %cst_5 = arith.constant 0.000000e+00 : f32
    %22 = vector.broadcast %cst_5 : f32 to vector<2x768xf32>
    %23 = arith.maximumf %21, %22 : vector<2x768xf32>
    %c0_6 = arith.constant 0 : index
    %c0_7 = arith.constant 0 : index
    %24 = vector.load %arg3[%c0_6, %c0_7] : memref<768x64xf32, #tpu.memory_space<vmem>>, vector<768x64xf32>
    %cst_8 = arith.constant dense<0.000000e+00> : vector<2x64xf32>
    %25 = tpu.matmul %23, %24, %cst_8 {dimension_numbers = #tpu.dot_dimension_numbers<[1], [0], [0], [1], [0, 0, 1, 1], [], []>} : vector<2x768xf32>, vector<768x64xf32>, vector<2x64xf32> -> vector<2x64xf32>
    %c0_9 = arith.constant 0 : index
    %c0_10 = arith.constant 0 : index
    %26 = vector.load %arg4[%c0_9, %c0_10] : memref<1x64xf32, #tpu.memory_space<vmem>>, vector<1x64xf32>
    %27 = vector.broadcast %26 : vector<1x64xf32> to vector<2x64xf32>
    %28 = arith.addf %25, %27 : vector<2x64xf32>
    %c0_11 = arith.constant 0 : index
    %c0_12 = arith.constant 0 : index
    %29 = vector.load %arg5[%c0_11, %c0_12] : memref<2x64xf32, #tpu.memory_space<vmem>>, vector<2x64xf32>
    tpu.vector_store %arg5[%c0_11, %c0_12], %28 {strides = array<i32>} : memref<2x64xf32, #tpu.memory_space<vmem>>, vector<2x64xf32>,
    return
  }
}

</mosaic_0001>

<llo_original>
// kernel: rnn_module_forward.1
$region0: #{rnn_module_forward.1}
  #allocation0 [shape = 'u32[]', space=smem, size = 0x4, offset = 0x4, fixed_abs, tag = 'smem constant byte address 0x4 - core index']
  #allocation1 [shape = 'u32[144,128]{1,0:T(1,128)}', space=vmem, size = 0x12000, scoped, tag = 'internal scratch']
  %s0 = inlined_call_operand.vmem [shape: f32[2,768], index: 0, kind: input, shape index: {}]
  %s1 = inlined_call_operand.hbm [shape: f32[768,768], index: 1, kind: input, shape index: {}]
  %s2 = inlined_call_operand.hbm [shape: f32[1,768], index: 2, kind: input, shape index: {}]
  %s3 = inlined_call_operand.vmem [shape: f32[768,64], index: 3, kind: input, shape index: {}]
  %s4 = inlined_call_operand.hbm [shape: f32[1,64], index: 4, kind: input, shape index: {}]
  %s5 = inlined_call_operand.hbm [shape: f32[2,64], index: 5, kind: output, shape index: {}]
  %s6 = sld [smem:[#allocation0]]
  $region42: #{rnn_module_forward.1} parent=0
    _
  %s8 = ssub.s32 1, %s6
  %s9 = scalar_select 0, %s8, %s6
  $region1: #{rnn_module_forward.1} parent=0
    #allocation2 [shape = 'u8[2359296]{0}', space=vmem, size = 0x240000, scoped, tag = 'input window, operand 1, single buffered']
    #allocation3 [shape = 's32[1]{0}', space=sflag, size = 0x4, scoped, tag = 'scoped memory for rnn_module_forward.1']
    #allocation4 [shape = 's32[1]{0}', space=sflag, size = 0x4, scoped, tag = 'scoped memory for rnn_module_forward.1']
    #allocation5 [shape = 'u8[3072]{0}', space=vmem, size = 0xc00, scoped, tag = 'input window, operand 2, single buffered']
    #allocation6 [shape = 's32[1]{0}', space=sflag, size = 0x4, scoped, tag = 'scoped memory for rnn_module_forward.1']
    #allocation7 [shape = 'u8[512]{0}', space=vmem, size = 0x400, scoped, tag = 'input window, operand 4, single buffered']
    #allocation8 [shape = 'u8[1024]{0}', space=vmem, size = 0x400, scoped, tag = 'output window, operand 0, single buffered']
    %10 = vsyncpa [#allocation3], 0
    %11 = vsyncpa [#allocation6], 0
    %12 = vsyncpa [#allocation4], 0
    // Predicated region
    $region2: #{rnn_module_forward.1} parent=1 // pred_check
      _
    $region3: #{rnn_module_forward.1} parent=1 // pred_check_branch
      %14 = sbr.rel (0) target = $region5
    $region4: #{rnn_module_forward.1} parent=1 // pred_region
      _
    $region5: #{rnn_module_forward.1} parent=1 // pred_fallthru
      _
    // Predicated region
    $region6: #{rnn_module_forward.1} parent=1 // pred_check
      _
    $region7: #{rnn_module_forward.1} parent=1 // pred_check_branch
      %16 = sbr.rel (0) target = $region9
    $region8: #{rnn_module_forward.1} parent=1 // pred_region
      %s18 = ssub.s32 73728, 73728
      %19 = vsyncadd [#allocation3], %s18
      %s20 = sshll.u32 [#allocation2], 4
      %s21 = int_to_ptr.vmem [resolvable:$true] %s20
      %26 = dma.hbm_to_vmem [thread:$0]  %s1, 73728, %s21, [#allocation3], 768, 768, 48
    $region9: #{rnn_module_forward.1} parent=1 // pred_fallthru
      _
    // Predicated region
    $region10: #{rnn_module_forward.1} parent=1 // pred_check
      _
    $region11: #{rnn_module_forward.1} parent=1 // pred_check_branch
      %28 = sbr.rel (0) target = $region13
    $region12: #{rnn_module_forward.1} parent=1 // pred_region
      %s30 = ssub.s32 96, 96
      %31 = vsyncadd [#allocation6], %s30
      %s33 = sshll.u32 [#allocation5], 4
      %s34 = int_to_ptr.vmem [resolvable:$true] %s33
      %36 = dma.hbm_to_vmem [thread:$0]  %s2, 96, %s34, [#allocation6]
    $region13: #{rnn_module_forward.1} parent=1 // pred_fallthru
      _
    // Predicated region
    $region14: #{rnn_module_forward.1} parent=1 // pred_check
      _
    $region15: #{rnn_module_forward.1} parent=1 // pred_check_branch
      %38 = sbr.rel (0) target = $region17
    $region16: #{rnn_module_forward.1} parent=1 // pred_region
      _
    $region17: #{rnn_module_forward.1} parent=1 // pred_fallthru
      _
    // Predicated region
    $region18: #{rnn_module_forward.1} parent=1 // pred_check
      _
    $region19: #{rnn_module_forward.1} parent=1 // pred_check_branch
      %40 = sbr.rel (0) target = $region21
    $region20: #{rnn_module_forward.1} parent=1 // pred_region
      %s42 = ssub.s32 16, 16
      %43 = vsyncadd [#allocation6], %s42
      %s45 = sshll.u32 [#allocation7], 4
      %s46 = int_to_ptr.vmem [resolvable:$true] %s45
      %48 = dma.hbm_to_vmem [thread:$0]  %s4, 16, %s46, [#allocation6]
    $region21: #{rnn_module_forward.1} parent=1 // pred_fallthru
      _
    // Predicated region
    $region22: #{rnn_module_forward.1} parent=1 // pred_check
      _
    $region23: #{rnn_module_forward.1} parent=1 // pred_check_branch
      %50 = sbr.rel (0) target = $region25
    $region24: #{rnn_module_forward.1} parent=1 // pred_region
      %51 = dma.done [#allocation3], 73728
    $region25: #{rnn_module_forward.1} parent=1 // pred_fallthru
      _
    // Predicated region
    $region26: #{rnn_module_forward.1} parent=1 // pred_check
      _
    $region27: #{rnn_module_forward.1} parent=1 // pred_check_branch
      %53 = sbr.rel (0) target = $region29
    $region28: #{rnn_module_forward.1} parent=1 // pred_region
      %54 = dma.done [#allocation6], 96
    $region29: #{rnn_module_forward.1} parent=1 // pred_fallthru
      _
    // Predicated region
    $region30: #{rnn_module_forward.1} parent=1 // pred_check
      _
    $region31: #{rnn_module_forward.1} parent=1 // pred_check_branch
      %56 = sbr.rel (0) target = $region33
    $region32: #{rnn_module_forward.1} parent=1 // pred_region
      %57 = dma.done [#allocation6], 16
    $region33: #{rnn_module_forward.1} parent=1 // pred_fallthru
      _
    %v58 = vld [vmem:[%s0] sm:$0xff]
    %v59 = vld [vmem:[%s0 + $0x8] sm:$0xf]
    %v60 = vld [vmem:[#allocation2] sm:$0xff]
    %v61 = vld [vmem:[#allocation2 + $0x8] sm:$0xff]
    %v62 = vld [vmem:[#allocation2 + $0x10] sm:$0xff]
    %v63 = vld [vmem:[#allocation2 + $0x18] sm:$0xff]
    %v64 = vld [vmem:[#allocation2 + $0x20] sm:$0xff]
    %v65 = vld [vmem:[#allocation2 + $0x28] sm:$0xff]
    %v66 = vld [vmem:[#allocation2 + $0x30] sm:$0xff]
    %v67 = vld [vmem:[#allocation2 + $0x38] sm:$0xff]
    %v68 = vld [vmem:[#allocation2 + $0x40] sm:$0xff]
    %v69 = vld [vmem:[#allocation2 + $0x48] sm:$0xff]
    %v70 = vld [vmem:[#allocation2 + $0x50] sm:$0xff]
    %v71 = vld [vmem:[#allocation2 + $0x58] sm:$0xff]
    %v72 = vld [vmem:[#allocation2 + $0x60] sm:$0xff]
    %v73 = vld [vmem:[#allocation2 + $0x68] sm:$0xff]
    %v74 = vld [vmem:[#allocation2 + $0x70] sm:$0xff]
    %v75 = vld [vmem:[#allocation2 + $0x78] sm:$0xff]
    %v76 = vld [vmem:[#allocation2 + $0x80] sm:$0xff]
    %v77 = vld [vmem:[#allocation2 + $0x88] sm:$0xff]
    %v78 = vld [vmem:[#allocation2 + $0x90] sm:$0xff]
    %v79 = vld [vmem:[#allocation2 + $0x98] sm:$0xff]
    %v80 = vld [vmem:[#allocation2 + $0xa0] sm:$0xff]
    %v81 = vld [vmem:[#allocation2 + $0xa8] sm:$0xff]
    %v82 = vld [vmem:[#allocation2 + $0xb0] sm:$0xff]
    %v83 = vld [vmem:[#allocation2 + $0xb8] sm:$0xff]
    %v84 = vld [vmem:[#allocation2 + $0xc0] sm:$0xff]
    %v85 = vld [vmem:[#allocation2 + $0xc8] sm:$0xff]
    %v86 = vld [vmem:[#allocation2 + $0xd0] sm:$0xff]
    %v87 = vld [vmem:[#allocation2 + $0xd8] sm:$0xff]
    %v88 = vld [vmem:[#allocation2 + $0xe0] sm:$0xff]
    %v89 = vld [vmem:[#allocation2 + $0xe8] sm:$0xff]
    %v90 = vld [vmem:[#allocation2 + $0xf0] sm:$0xff]
    %v91 = vld [vmem:[#allocation2 + $0xf8] sm:$0xff]
    %v92 = vld [vmem:[#allocation2 + $0x100] sm:$0xff]
    %v93 = vld [vmem:[#allocation2 + $0x108] sm:$0xff]
    %v94 = vld [vmem:[#allocation2 + $0x110] sm:$0xff]
    %v95 = vld [vmem:[#allocation2 + $0x118] sm:$0xff]
    %v96 = vld [vmem:[#allocation2 + $0x120] sm:$0xff]
    %v97 = vld [vmem:[#allocation2 + $0x128] sm:$0xff]
    %v98 = vld [vmem:[#allocation2 + $0x130] sm:$0xff]
    %v99 = vld [vmem:[#allocation2 + $0x138] sm:$0xff]
    %v100 = vld [vmem:[#allocation2 + $0x140] sm:$0xff]
    %v101 = vld [vmem:[#allocation2 + $0x148] sm:$0xff]
    %v102 = vld [vmem:[#allocation2 + $0x150] sm:$0xff]
    %v103 = vld [vmem:[#allocation2 + $0x158] sm:$0xff]
    %v104 = vld [vmem:[#allocation2 + $0x160] sm:$0xff]
    %v105 = vld [vmem:[#allocation2 + $0x168] sm:$0xff]
    %v106 = vld [vmem:[#allocation2 + $0x170] sm:$0xff]
    %v107 = vld [vmem:[#allocation2 + $0x178] sm:$0xff]
    %v108 = vld [vmem:[#allocation2 + $0x180] sm:$0xff]
    %v109 = vld [vmem:[#allocation2 + $0x188] sm:$0xff]
    %v110 = vld [vmem:[#allocation2 + $0x190] sm:$0xff]
    %v111 = vld [vmem:[#allocation2 + $0x198] sm:$0xff]
    %v112 = vld [vmem:[#allocation2 + $0x1a0] sm:$0xff]
    %v113 = vld [vmem:[#allocation2 + $0x1a8] sm:$0xff]
    %v114 = vld [vmem:[#allocation2 + $0x1b0] sm:$0xff]
    %v115 = vld [vmem:[#allocation2 + $0x1b8] sm:$0xff]
    %v116 = vld [vmem:[#allocation2 + $0x1c0] sm:$0xff]
    %v117 = vld [vmem:[#allocation2 + $0x1c8] sm:$0xff]
    %v118 = vld [vmem:[#allocation2 + $0x1d0] sm:$0xff]
    %v119 = vld [vmem:[#allocation2 + $0x1d8] sm:$0xff]
    %v120 = vld [vmem:[#allocation2 + $0x1e0] sm:$0xff]
    %v121 = vld [vmem:[#allocation2 + $0x1e8] sm:$0xff]
    %v122 = vld [vmem:[#allocation2 + $0x1f0] sm:$0xff]
    %v123 = vld [vmem:[#allocation2 + $0x1f8] sm:$0xff]
    %v124 = vld [vmem:[#allocation2 + $0x200] sm:$0xff]
    %v125 = vld [vmem:[#allocation2 + $0x208] sm:$0xff]
    %v126 = vld [vmem:[#allocation2 + $0x210] sm:$0xff]
    %v127 = vld [vmem:[#allocation2 + $0x218] sm:$0xff]
    %v128 = vld [vmem:[#allocation2 + $0x220] sm:$0xff]
    %v129 = vld [vmem:[#allocation2 + $0x228] sm:$0xff]
    %v130 = vld [vmem:[#allocation2 + $0x230] sm:$0xff]
    %v131 = vld [vmem:[#allocation2 + $0x238] sm:$0xff]
    %v132 = vld [vmem:[#allocation2 + $0x240] sm:$0xff]
    %v133 = vld [vmem:[#allocation2 + $0x248] sm:$0xff]
    %v134 = vld [vmem:[#allocation2 + $0x250] sm:$0xff]
    %v135 = vld [vmem:[#allocation2 + $0x258] sm:$0xff]
    %v136 = vld [vmem:[#allocation2 + $0x260] sm:$0xff]
    %v137 = vld [vmem:[#allocation2 + $0x268] sm:$0xff]
    %v138 = vld [vmem:[#allocation2 + $0x270] sm:$0xff]
    %v139 = vld [vmem:[#allocation2 + $0x278] sm:$0xff]
    %v140 = vld [vmem:[#allocation2 + $0x280] sm:$0xff]
    %v141 = vld [vmem:[#allocation2 + $0x288] sm:$0xff]
    %v142 = vld [vmem:[#allocation2 + $0x290] sm:$0xff]
    %v143 = vld [vmem:[#allocation2 + $0x298] sm:$0xff]
    %v144 = vld [vmem:[#allocation2 + $0x2a0] sm:$0xff]
    %v145 = vld [vmem:[#allocation2 + $0x2a8] sm:$0xff]
    %v146 = vld [vmem:[#allocation2 + $0x2b0] sm:$0xff]
    %v147 = vld [vmem:[#allocation2 + $0x2b8] sm:$0xff]
    %v148 = vld [vmem:[#allocation2 + $0x2c0] sm:$0xff]
    %v149 = vld [vmem:[#allocation2 + $0x2c8] sm:$0xff]
    %v150 = vld [vmem:[#allocation2 + $0x2d0] sm:$0xff]
    %v151 = vld [vmem:[#allocation2 + $0x2d8] sm:$0xff]
    %v152 = vld [vmem:[#allocation2 + $0x2e0] sm:$0xff]
    %v153 = vld [vmem:[#allocation2 + $0x2e8] sm:$0xff]
    %v154 = vld [vmem:[#allocation2 + $0x2f0] sm:$0xff]
    %v155 = vld [vmem:[#allocation2 + $0x2f8] sm:$0xff]
    %v156 = vld [vmem:[#allocation2 + $0x300] sm:$0xff]
    %v157 = vld [vmem:[#allocation2 + $0x308] sm:$0xff]
    %v158 = vld [vmem:[#allocation2 + $0x310] sm:$0xff]
    %v159 = vld [vmem:[#allocation2 + $0x318] sm:$0xff]
    %v160 = vld [vmem:[#allocation2 + $0x320] sm:$0xff]
    %v161 = vld [vmem:[#allocation2 + $0x328] sm:$0xff]
    %v162 = vld [vmem:[#allocation2 + $0x330] sm:$0xff]
    %v163 = vld [vmem:[#allocation2 + $0x338] sm:$0xff]
    %v164 = vld [vmem:[#allocation2 + $0x340] sm:$0xff]
    %v165 = vld [vmem:[#allocation2 + $0x348] sm:$0xff]
    %v166 = vld [vmem:[#allocation2 + $0x350] sm:$0xff]
    %v167 = vld [vmem:[#allocation2 + $0x358] sm:$0xff]
    %v168 = vld [vmem:[#allocation2 + $0x360] sm:$0xff]
    %v169 = vld [vmem:[#allocation2 + $0x368] sm:$0xff]
    %v170 = vld [vmem:[#allocation2 + $0x370] sm:$0xff]
    %v171 = vld [vmem:[#allocation2 + $0x378] sm:$0xff]
    %v172 = vld [vmem:[#allocation2 + $0x380] sm:$0xff]
    %v173 = vld [vmem:[#allocation2 + $0x388] sm:$0xff]
    %v174 = vld [vmem:[#allocation2 + $0x390] sm:$0xff]
    %v175 = vld [vmem:[#allocation2 + $0x398] sm:$0xff]
    %v176 = vld [vmem:[#allocation2 + $0x3a0] sm:$0xff]
    %v177 = vld [vmem:[#allocation2 + $0x3a8] sm:$0xff]
    %v178 = vld [vmem:[#allocation2 + $0x3b0] sm:$0xff]
    %v179 = vld [vmem:[#allocation2 + $0x3b8] sm:$0xff]
    %v180 = vld [vmem:[#allocation2 + $0x3c0] sm:$0xff]
    %v181 = vld [vmem:[#allocation2 + $0x3c8] sm:$0xff]
    %v182 = vld [vmem:[#allocation2 + $0x3d0] sm:$0xff]
    %v183 = vld [vmem:[#allocation2 + $0x3d8] sm:$0xff]
    %v184 = vld [vmem:[#allocation2 + $0x3e0] sm:$0xff]
    %v185 = vld [vmem:[#allocation2 + $0x3e8] sm:$0xff]
    %v186 = vld [vmem:[#allocation2 + $0x3f0] sm:$0xff]
    %v187 = vld [vmem:[#allocation2 + $0x3f8] sm:$0xff]
    %v188 = vld [vmem:[#allocation2 + $0x400] sm:$0xff]
    %v189 = vld [vmem:[#allocation2 + $0x408] sm:$0xff]
    %v190 = vld [vmem:[#allocation2 + $0x410] sm:$0xff]
    %v191 = vld [vmem:[#allocation2 + $0x418] sm:$0xff]
    %v192 = vld [vmem:[#allocation2 + $0x420] sm:$0xff]
    %v193 = vld [vmem:[#allocation2 + $0x428] sm:$0xff]
    %v194 = vld [vmem:[#allocation2 + $0x430] sm:$0xff]
    %v195 = vld [vmem:[#allocation2 + $0x438] sm:$0xff]
    %v196 = vld [vmem:[#allocation2 + $0x440] sm:$0xff]
    %v197 = vld [vmem:[#allocation2 + $0x448] sm:$0xff]
    %v198 = vld [vmem:[#allocation2 + $0x450] sm:$0xff]
    %v199 = vld [vmem:[#allocation2 + $0x458] sm:$0xff]
    %v200 = vld [vmem:[#allocation2 + $0x460] sm:$0xff]
    %v201 = vld [vmem:[#allocation2 + $0x468] sm:$0xff]
    %v202 = vld [vmem:[#allocation2 + $0x470] sm:$0xff]
    %v203 = vld [vmem:[#allocation2 + $0x478] sm:$0xff]
    %v204 = vld [vmem:[#allocation2 + $0x480] sm:$0xff]
    %v205 = vld [vmem:[#allocation2 + $0x488] sm:$0xff]
    %v206 = vld [vmem:[#allocation2 + $0x490] sm:$0xff]
    %v207 = vld [vmem:[#allocation2 + $0x498] sm:$0xff]
    %v208 = vld [vmem:[#allocation2 + $0x4a0] sm:$0xff]
    %v209 = vld [vmem:[#allocation2 + $0x4a8] sm:$0xff]
    %v210 = vld [vmem:[#allocation2 + $0x4b0] sm:$0xff]
    %v211 = vld [vmem:[#allocation2 + $0x4b8] sm:$0xff]
    %v212 = vld [vmem:[#allocation2 + $0x4c0] sm:$0xff]
    %v213 = vld [vmem:[#allocation2 + $0x4c8] sm:$0xff]
    %v214 = vld [vmem:[#allocation2 + $0x4d0] sm:$0xff]
    %v215 = vld [vmem:[#allocation2 + $0x4d8] sm:$0xff]
    %v216 = vld [vmem:[#allocation2 + $0x4e0] sm:$0xff]
    %v217 = vld [vmem:[#allocation2 + $0x4e8] sm:$0xff]
    %v218 = vld [vmem:[#allocation2 + $0x4f0] sm:$0xff]
    %v219 = vld [vmem:[#allocation2 + $0x4f8] sm:$0xff]
    %v220 = vld [vmem:[#allocation2 + $0x500] sm:$0xff]
    %v221 = vld [vmem:[#allocation2 + $0x508] sm:$0xff]
    %v222 = vld [vmem:[#allocation2 + $0x510] sm:$0xff]
    %v223 = vld [vmem:[#allocation2 + $0x518] sm:$0xff]
    %v224 = vld [vmem:[#allocation2 + $0x520] sm:$0xff]
    %v225 = vld [vmem:[#allocation2 + $0x528] sm:$0xff]
    %v226 = vld [vmem:[#allocation2 + $0x530] sm:$0xff]
    %v227 = vld [vmem:[#allocation2 + $0x538] sm:$0xff]
    %v228 = vld [vmem:[#allocation2 + $0x540] sm:$0xff]
    %v229 = vld [vmem:[#allocation2 + $0x548] sm:$0xff]
    %v230 = vld [vmem:[#allocation2 + $0x550] sm:$0xff]
    %v231 = vld [vmem:[#allocation2 + $0x558] sm:$0xff]
    %v232 = vld [vmem:[#allocation2 + $0x560] sm:$0xff]
    %v233 = vld [vmem:[#allocation2 + $0x568] sm:$0xff]
    %v234 = vld [vmem:[#allocation2 + $0x570] sm:$0xff]
    %v235 = vld [vmem:[#allocation2 + $0x578] sm:$0xff]
    %v236 = vld [vmem:[#allocation2 + $0x580] sm:$0xff]
    %v237 = vld [vmem:[#allocation2 + $0x588] sm:$0xff]
    %v238 = vld [vmem:[#allocation2 + $0x590] sm:$0xff]
    %v239 = vld [vmem:[#allocation2 + $0x598] sm:$0xff]
    %v240 = vld [vmem:[#allocation2 + $0x5a0] sm:$0xff]
    %v241 = vld [vmem:[#allocation2 + $0x5a8] sm:$0xff]
    %v242 = vld [vmem:[#allocation2 + $0x5b0] sm:$0xff]
    %v243 = vld [vmem:[#allocation2 + $0x5b8] sm:$0xff]
    %v244 = vld [vmem:[#allocation2 + $0x5c0] sm:$0xff]
    %v245 = vld [vmem:[#allocation2 + $0x5c8] sm:$0xff]
    %v246 = vld [vmem:[#allocation2 + $0x5d0] sm:$0xff]
    %v247 = vld [vmem:[#allocation2 + $0x5d8] sm:$0xff]
    %v248 = vld [vmem:[#allocation2 + $0x5e0] sm:$0xff]
    %v249 = vld [vmem:[#allocation2 + $0x5e8] sm:$0xff]
    %v250 = vld [vmem:[#allocation2 + $0x5f0] sm:$0xff]
    %v251 = vld [vmem:[#allocation2 + $0x5f8] sm:$0xff]
    %v252 = vld [vmem:[#allocation2 + $0x600] sm:$0xff]
    %v253 = vld [vmem:[#allocation2 + $0x608] sm:$0xff]
    %v254 = vld [vmem:[#allocation2 + $0x610] sm:$0xff]
    %v255 = vld [vmem:[#allocation2 + $0x618] sm:$0xff]
    %v256 = vld [vmem:[#allocation2 + $0x620] sm:$0xff]
    %v257 = vld [vmem:[#allocation2 + $0x628] sm:$0xff]
    %v258 = vld [vmem:[#allocation2 + $0x630] sm:$0xff]
    %v259 = vld [vmem:[#allocation2 + $0x638] sm:$0xff]
    %v260 = vld [vmem:[#allocation2 + $0x640] sm:$0xff]
    %v261 = vld [vmem:[#allocation2 + $0x648] sm:$0xff]
    %v262 = vld [vmem:[#allocation2 + $0x650] sm:$0xff]
    %v263 = vld [vmem:[#allocation2 + $0x658] sm:$0xff]
    %v264 = vld [vmem:[#allocation2 + $0x660] sm:$0xff]
    %v265 = vld [vmem:[#allocation2 + $0x668] sm:$0xff]
    %v266 = vld [vmem:[#allocation2 + $0x670] sm:$0xff]
    %v267 = vld [vmem:[#allocation2 + $0x678] sm:$0xff]
    %v268 = vld [vmem:[#allocation2 + $0x680] sm:$0xff]
    %v269 = vld [vmem:[#allocation2 + $0x688] sm:$0xff]
    %v270 = vld [vmem:[#allocation2 + $0x690] sm:$0xff]
    %v271 = vld [vmem:[#allocation2 + $0x698] sm:$0xff]
    %v272 = vld [vmem:[#allocation2 + $0x6a0] sm:$0xff]
    %v273 = vld [vmem:[#allocation2 + $0x6a8] sm:$0xff]
    %v274 = vld [vmem:[#allocation2 + $0x6b0] sm:$0xff]
    %v275 = vld [vmem:[#allocation2 + $0x6b8] sm:$0xff]
    %v276 = vld [vmem:[#allocation2 + $0x6c0] sm:$0xff]
    %v277 = vld [vmem:[#allocation2 + $0x6c8] sm:$0xff]
    %v278 = vld [vmem:[#allocation2 + $0x6d0] sm:$0xff]
    %v279 = vld [vmem:[#allocation2 + $0x6d8] sm:$0xff]
    %v280 = vld [vmem:[#allocation2 + $0x6e0] sm:$0xff]
    %v281 = vld [vmem:[#allocation2 + $0x6e8] sm:$0xff]
    %v282 = vld [vmem:[#allocation2 + $0x6f0] sm:$0xff]
    %v283 = vld [vmem:[#allocation2 + $0x6f8] sm:$0xff]
    %v284 = vld [vmem:[#allocation2 + $0x700] sm:$0xff]
    %v285 = vld [vmem:[#allocation2 + $0x708] sm:$0xff]
    %v286 = vld [vmem:[#allocation2 + $0x710] sm:$0xff]
    %v287 = vld [vmem:[#allocation2 + $0x718] sm:$0xff]
    %v288 = vld [vmem:[#allocation2 + $0x720] sm:$0xff]
    %v289 = vld [vmem:[#allocation2 + $0x728] sm:$0xff]
    %v290 = vld [vmem:[#allocation2 + $0x730] sm:$0xff]
    %v291 = vld [vmem:[#allocation2 + $0x738] sm:$0xff]
    %v292 = vld [vmem:[#allocation2 + $0x740] sm:$0xff]
    %v293 = vld [vmem:[#allocation2 + $0x748] sm:$0xff]
    %v294 = vld [vmem:[#allocation2 + $0x750] sm:$0xff]
    %v295 = vld [vmem:[#allocation2 + $0x758] sm:$0xff]
    %v296 = vld [vmem:[#allocation2 + $0x760] sm:$0xff]
    %v297 = vld [vmem:[#allocation2 + $0x768] sm:$0xff]
    %v298 = vld [vmem:[#allocation2 + $0x770] sm:$0xff]
    %v299 = vld [vmem:[#allocation2 + $0x778] sm:$0xff]
    %v300 = vld [vmem:[#allocation2 + $0x780] sm:$0xff]
    %v301 = vld [vmem:[#allocation2 + $0x788] sm:$0xff]
    %v302 = vld [vmem:[#allocation2 + $0x790] sm:$0xff]
    %v303 = vld [vmem:[#allocation2 + $0x798] sm:$0xff]
    %v304 = vld [vmem:[#allocation2 + $0x7a0] sm:$0xff]
    %v305 = vld [vmem:[#allocation2 + $0x7a8] sm:$0xff]
    %v306 = vld [vmem:[#allocation2 + $0x7b0] sm:$0xff]
    %v307 = vld [vmem:[#allocation2 + $0x7b8] sm:$0xff]
    %v308 = vld [vmem:[#allocation2 + $0x7c0] sm:$0xff]
    %v309 = vld [vmem:[#allocation2 + $0x7c8] sm:$0xff]
    %v310 = vld [vmem:[#allocation2 + $0x7d0] sm:$0xff]
    %v311 = vld [vmem:[#allocation2 + $0x7d8] sm:$0xff]
    %v312 = vld [vmem:[#allocation2 + $0x7e0] sm:$0xff]
    %v313 = vld [vmem:[#allocation2 + $0x7e8] sm:$0xff]
    %v314 = vld [vmem:[#allocation2 + $0x7f0] sm:$0xff]
    %v315 = vld [vmem:[#allocation2 + $0x7f8] sm:$0xff]
    %v316 = vld [vmem:[#allocation2 + $0x800] sm:$0xff]
    %v317 = vld [vmem:[#allocation2 + $0x808] sm:$0xff]
    %v318 = vld [vmem:[#allocation2 + $0x810] sm:$0xff]
    %v319 = vld [vmem:[#allocation2 + $0x818] sm:$0xff]
    %v320 = vld [vmem:[#allocation2 + $0x820] sm:$0xff]
    %v321 = vld [vmem:[#allocation2 + $0x828] sm:$0xff]
    %v322 = vld [vmem:[#allocation2 + $0x830] sm:$0xff]
    %v323 = vld [vmem:[#allocation2 + $0x838] sm:$0xff]
    %v324 = vld [vmem:[#allocation2 + $0x840] sm:$0xff]
    %v325 = vld [vmem:[#allocation2 + $0x848] sm:$0xff]
    %v326 = vld [vmem:[#allocation2 + $0x850] sm:$0xff]
    %v327 = vld [vmem:[#allocation2 + $0x858] sm:$0xff]
    %v328 = vld [vmem:[#allocation2 + $0x860] sm:$0xff]
    %v329 = vld [vmem:[#allocation2 + $0x868] sm:$0xff]
    %v330 = vld [vmem:[#allocation2 + $0x870] sm:$0xff]
    %v331 = vld [vmem:[#allocation2 + $0x878] sm:$0xff]
    %v332 = vld [vmem:[#allocation2 + $0x880] sm:$0xff]
    %v333 = vld [vmem:[#allocation2 + $0x888] sm:$0xff]
    %v334 = vld [vmem:[#allocation2 + $0x890] sm:$0xff]
    %v335 = vld [vmem:[#allocation2 + $0x898] sm:$0xff]
    %v336 = vld [vmem:[#allocation2 + $0x8a0] sm:$0xff]
    %v337 = vld [vmem:[#allocation2 + $0x8a8] sm:$0xff]
    %v338 = vld [vmem:[#allocation2 + $0x8b0] sm:$0xff]
    %v339 = vld [vmem:[#allocation2 + $0x8b8] sm:$0xff]
    %v340 = vld [vmem:[#allocation2 + $0x8c0] sm:$0xff]
    %v341 = vld [vmem:[#allocation2 + $0x8c8] sm:$0xff]
    %v342 = vld [vmem:[#allocation2 + $0x8d0] sm:$0xff]
    %v343 = vld [vmem:[#allocation2 + $0x8d8] sm:$0xff]
    %v344 = vld [vmem:[#allocation2 + $0x8e0] sm:$0xff]
    %v345 = vld [vmem:[#allocation2 + $0x8e8] sm:$0xff]
    %v346 = vld [vmem:[#allocation2 + $0x8f0] sm:$0xff]
    %v347 = vld [vmem:[#allocation2 + $0x8f8] sm:$0xff]
    %v348 = vld [vmem:[#allocation2 + $0x900] sm:$0xff]
    %v349 = vld [vmem:[#allocation2 + $0x908] sm:$0xff]
    %v350 = vld [vmem:[#allocation2 + $0x910] sm:$0xff]
    %v351 = vld [vmem:[#allocation2 + $0x918] sm:$0xff]
    %v352 = vld [vmem:[#allocation2 + $0x920] sm:$0xff]
    %v353 = vld [vmem:[#allocation2 + $0x928] sm:$0xff]
    %v354 = vld [vmem:[#allocation2 + $0x930] sm:$0xff]
    %v355 = vld [vmem:[#allocation2 + $0x938] sm:$0xff]
    %v356 = vld [vmem:[#allocation2 + $0x940] sm:$0xff]
    %v357 = vld [vmem:[#allocation2 + $0x948] sm:$0xff]
    %v358 = vld [vmem:[#allocation2 + $0x950] sm:$0xff]
    %v359 = vld [vmem:[#allocation2 + $0x958] sm:$0xff]
    %v360 = vld [vmem:[#allocation2 + $0x960] sm:$0xff]
    %v361 = vld [vmem:[#allocation2 + $0x968] sm:$0xff]
    %v362 = vld [vmem:[#allocation2 + $0x970] sm:$0xff]
    %v363 = vld [vmem:[#allocation2 + $0x978] sm:$0xff]
    %v364 = vld [vmem:[#allocation2 + $0x980] sm:$0xff]
    %v365 = vld [vmem:[#allocation2 + $0x988] sm:$0xff]
    %v366 = vld [vmem:[#allocation2 + $0x990] sm:$0xff]
    %v367 = vld [vmem:[#allocation2 + $0x998] sm:$0xff]
    %v368 = vld [vmem:[#allocation2 + $0x9a0] sm:$0xff]
    %v369 = vld [vmem:[#allocation2 + $0x9a8] sm:$0xff]
    %v370 = vld [vmem:[#allocation2 + $0x9b0] sm:$0xff]
    %v371 = vld [vmem:[#allocation2 + $0x9b8] sm:$0xff]
    %v372 = vld [vmem:[#allocation2 + $0x9c0] sm:$0xff]
    %v373 = vld [vmem:[#allocation2 + $0x9c8] sm:$0xff]
    %v374 = vld [vmem:[#allocation2 + $0x9d0] sm:$0xff]
    %v375 = vld [vmem:[#allocation2 + $0x9d8] sm:$0xff]
    %v376 = vld [vmem:[#allocation2 + $0x9e0] sm:$0xff]
    %v377 = vld [vmem:[#allocation2 + $0x9e8] sm:$0xff]
    %v378 = vld [vmem:[#allocation2 + $0x9f0] sm:$0xff]
    %v379 = vld [vmem:[#allocation2 + $0x9f8] sm:$0xff]
    %v380 = vld [vmem:[#allocation2 + $0xa00] sm:$0xff]
    %v381 = vld [vmem:[#allocation2 + $0xa08] sm:$0xff]
    %v382 = vld [vmem:[#allocation2 + $0xa10] sm:$0xff]
    %v383 = vld [vmem:[#allocation2 + $0xa18] sm:$0xff]
    %v384 = vld [vmem:[#allocation2 + $0xa20] sm:$0xff]
    %v385 = vld [vmem:[#allocation2 + $0xa28] sm:$0xff]
    %v386 = vld [vmem:[#allocation2 + $0xa30] sm:$0xff]
    %v387 = vld [vmem:[#allocation2 + $0xa38] sm:$0xff]
    %v388 = vld [vmem:[#allocation2 + $0xa40] sm:$0xff]
    %v389 = vld [vmem:[#allocation2 + $0xa48] sm:$0xff]
    %v390 = vld [vmem:[#allocation2 + $0xa50] sm:$0xff]
    %v391 = vld [vmem:[#allocation2 + $0xa58] sm:$0xff]
    %v392 = vld [vmem:[#allocation2 + $0xa60] sm:$0xff]
    %v393 = vld [vmem:[#allocation2 + $0xa68] sm:$0xff]
    %v394 = vld [vmem:[#allocation2 + $0xa70] sm:$0xff]
    %v395 = vld [vmem:[#allocation2 + $0xa78] sm:$0xff]
    %v396 = vld [vmem:[#allocation2 + $0xa80] sm:$0xff]
    %v397 = vld [vmem:[#allocation2 + $0xa88] sm:$0xff]
    %v398 = vld [vmem:[#allocation2 + $0xa90] sm:$0xff]
    %v399 = vld [vmem:[#allocation2 + $0xa98] sm:$0xff]
    %v400 = vld [vmem:[#allocation2 + $0xaa0] sm:$0xff]
    %v401 = vld [vmem:[#allocation2 + $0xaa8] sm:$0xff]
    %v402 = vld [vmem:[#allocation2 + $0xab0] sm:$0xff]
    %v403 = vld [vmem:[#allocation2 + $0xab8] sm:$0xff]
    %v404 = vld [vmem:[#allocation2 + $0xac0] sm:$0xff]
    %v405 = vld [vmem:[#allocation2 + $0xac8] sm:$0xff]
    %v406 = vld [vmem:[#allocation2 + $0xad0] sm:$0xff]
    %v407 = vld [vmem:[#allocation2 + $0xad8] sm:$0xff]
    %v408 = vld [vmem:[#allocation2 + $0xae0] sm:$0xff]
    %v409 = vld [vmem:[#allocation2 + $0xae8] sm:$0xff]
    %v410 = vld [vmem:[#allocation2 + $0xaf0] sm:$0xff]
    %v411 = vld [vmem:[#allocation2 + $0xaf8] sm:$0xff]
    %v412 = vld [vmem:[#allocation2 + $0xb00] sm:$0xff]
    %v413 = vld [vmem:[#allocation2 + $0xb08] sm:$0xff]
    %v414 = vld [vmem:[#allocation2 + $0xb10] sm:$0xff]
    %v415 = vld [vmem:[#allocation2 + $0xb18] sm:$0xff]
    %v416 = vld [vmem:[#allocation2 + $0xb20] sm:$0xff]
    %v417 = vld [vmem:[#allocation2 + $0xb28] sm:$0xff]
    %v418 = vld [vmem:[#allocation2 + $0xb30] sm:$0xff]
    %v419 = vld [vmem:[#allocation2 + $0xb38] sm:$0xff]
    %v420 = vld [vmem:[#allocation2 + $0xb40] sm:$0xff]
    %v421 = vld [vmem:[#allocation2 + $0xb48] sm:$0xff]
    %v422 = vld [vmem:[#allocation2 + $0xb50] sm:$0xff]
    %v423 = vld [vmem:[#allocation2 + $0xb58] sm:$0xff]
    %v424 = vld [vmem:[#allocation2 + $0xb60] sm:$0xff]
    %v425 = vld [vmem:[#allocation2 + $0xb68] sm:$0xff]
    %v426 = vld [vmem:[#allocation2 + $0xb70] sm:$0xff]
    %v427 = vld [vmem:[#allocation2 + $0xb78] sm:$0xff]
    %v428 = vld [vmem:[#allocation2 + $0xb80] sm:$0xff]
    %v429 = vld [vmem:[#allocation2 + $0xb88] sm:$0xff]
    %v430 = vld [vmem:[#allocation2 + $0xb90] sm:$0xff]
    %v431 = vld [vmem:[#allocation2 + $0xb98] sm:$0xff]
    %v432 = vld [vmem:[#allocation2 + $0xba0] sm:$0xff]
    %v433 = vld [vmem:[#allocation2 + $0xba8] sm:$0xff]
    %v434 = vld [vmem:[#allocation2 + $0xbb0] sm:$0xff]
    %v435 = vld [vmem:[#allocation2 + $0xbb8] sm:$0xff]
    %v436 = vld [vmem:[#allocation2 + $0xbc0] sm:$0xff]
    %v437 = vld [vmem:[#allocation2 + $0xbc8] sm:$0xff]
    %v438 = vld [vmem:[#allocation2 + $0xbd0] sm:$0xff]
    %v439 = vld [vmem:[#allocation2 + $0xbd8] sm:$0xff]
    %v440 = vld [vmem:[#allocation2 + $0xbe0] sm:$0xff]
    %v441 = vld [vmem:[#allocation2 + $0xbe8] sm:$0xff]
    %v442 = vld [vmem:[#allocation2 + $0xbf0] sm:$0xff]
    %v443 = vld [vmem:[#allocation2 + $0xbf8] sm:$0xff]
    %v444 = vld [vmem:[#allocation2 + $0xc00] sm:$0xff]
    %v445 = vld [vmem:[#allocation2 + $0xc08] sm:$0xff]
    %v446 = vld [vmem:[#allocation2 + $0xc10] sm:$0xff]
    %v447 = vld [vmem:[#allocation2 + $0xc18] sm:$0xff]
    %v448 = vld [vmem:[#allocation2 + $0xc20] sm:$0xff]
    %v449 = vld [vmem:[#allocation2 + $0xc28] sm:$0xff]
    %v450 = vld [vmem:[#allocation2 + $0xc30] sm:$0xff]
    %v451 = vld [vmem:[#allocation2 + $0xc38] sm:$0xff]
    %v452 = vld [vmem:[#allocation2 + $0xc40] sm:$0xff]
    %v453 = vld [vmem:[#allocation2 + $0xc48] sm:$0xff]
    %v454 = vld [vmem:[#allocation2 + $0xc50] sm:$0xff]
    %v455 = vld [vmem:[#allocation2 + $0xc58] sm:$0xff]
    %v456 = vld [vmem:[#allocation2 + $0xc60] sm:$0xff]
    %v457 = vld [vmem:[#allocation2 + $0xc68] sm:$0xff]
    %v458 = vld [vmem:[#allocation2 + $0xc70] sm:$0xff]
    %v459 = vld [vmem:[#allocation2 + $0xc78] sm:$0xff]
    %v460 = vld [vmem:[#allocation2 + $0xc80] sm:$0xff]
    %v461 = vld [vmem:[#allocation2 + $0xc88] sm:$0xff]
    %v462 = vld [vmem:[#allocation2 + $0xc90] sm:$0xff]
    %v463 = vld [vmem:[#allocation2 + $0xc98] sm:$0xff]
    %v464 = vld [vmem:[#allocation2 + $0xca0] sm:$0xff]
    %v465 = vld [vmem:[#allocation2 + $0xca8] sm:$0xff]
    %v466 = vld [vmem:[#allocation2 + $0xcb0] sm:$0xff]
    %v467 = vld [vmem:[#allocation2 + $0xcb8] sm:$0xff]
    %v468 = vld [vmem:[#allocation2 + $0xcc0] sm:$0xff]
    %v469 = vld [vmem:[#allocation2 + $0xcc8] sm:$0xff]
    %v470 = vld [vmem:[#allocation2 + $0xcd0] sm:$0xff]
    %v471 = vld [vmem:[#allocation2 + $0xcd8] sm:$0xff]
    %v472 = vld [vmem:[#allocation2 + $0xce0] sm:$0xff]
    %v473 = vld [vmem:[#allocation2 + $0xce8] sm:$0xff]
    %v474 = vld [vmem:[#allocation2 + $0xcf0] sm:$0xff]
    %v475 = vld [vmem:[#allocation2 + $0xcf8] sm:$0xff]
    %v476 = vld [vmem:[#allocation2 + $0xd00] sm:$0xff]
    %v477 = vld [vmem:[#allocation2 + $0xd08] sm:$0xff]
    %v478 = vld [vmem:[#allocation2 + $0xd10] sm:$0xff]
    %v479 = vld [vmem:[#allocation2 + $0xd18] sm:$0xff]
    %v480 = vld [vmem:[#allocation2 + $0xd20] sm:$0xff]
    %v481 = vld [vmem:[#allocation2 + $0xd28] sm:$0xff]
    %v482 = vld [vmem:[#allocation2 + $0xd30] sm:$0xff]
    %v483 = vld [vmem:[#allocation2 + $0xd38] sm:$0xff]
    %v484 = vld [vmem:[#allocation2 + $0xd40] sm:$0xff]
    %v485 = vld [vmem:[#allocation2 + $0xd48] sm:$0xff]
    %v486 = vld [vmem:[#allocation2 + $0xd50] sm:$0xff]
    %v487 = vld [vmem:[#allocation2 + $0xd58] sm:$0xff]
    %v488 = vld [vmem:[#allocation2 + $0xd60] sm:$0xff]
    %v489 = vld [vmem:[#allocation2 + $0xd68] sm:$0xff]
    %v490 = vld [vmem:[#allocation2 + $0xd70] sm:$0xff]
    %v491 = vld [vmem:[#allocation2 + $0xd78] sm:$0xff]
    %v492 = vld [vmem:[#allocation2 + $0xd80] sm:$0xff]
    %v493 = vld [vmem:[#allocation2 + $0xd88] sm:$0xff]
    %v494 = vld [vmem:[#allocation2 + $0xd90] sm:$0xff]
    %v495 = vld [vmem:[#allocation2 + $0xd98] sm:$0xff]
    %v496 = vld [vmem:[#allocation2 + $0xda0] sm:$0xff]
    %v497 = vld [vmem:[#allocation2 + $0xda8] sm:$0xff]
    %v498 = vld [vmem:[#allocation2 + $0xdb0] sm:$0xff]
    %v499 = vld [vmem:[#allocation2 + $0xdb8] sm:$0xff]
    %v500 = vld [vmem:[#allocation2 + $0xdc0] sm:$0xff]
    %v501 = vld [vmem:[#allocation2 + $0xdc8] sm:$0xff]
    %v502 = vld [vmem:[#allocation2 + $0xdd0] sm:$0xff]
    %v503 = vld [vmem:[#allocation2 + $0xdd8] sm:$0xff]
    %v504 = vld [vmem:[#allocation2 + $0xde0] sm:$0xff]
    %v505 = vld [vmem:[#allocation2 + $0xde8] sm:$0xff]
    %v506 = vld [vmem:[#allocation2 + $0xdf0] sm:$0xff]
    %v507 = vld [vmem:[#allocation2 + $0xdf8] sm:$0xff]
    %v508 = vld [vmem:[#allocation2 + $0xe00] sm:$0xff]
    %v509 = vld [vmem:[#allocation2 + $0xe08] sm:$0xff]
    %v510 = vld [vmem:[#allocation2 + $0xe10] sm:$0xff]
    %v511 = vld [vmem:[#allocation2 + $0xe18] sm:$0xff]
    %v512 = vld [vmem:[#allocation2 + $0xe20] sm:$0xff]
    %v513 = vld [vmem:[#allocation2 + $0xe28] sm:$0xff]
    %v514 = vld [vmem:[#allocation2 + $0xe30] sm:$0xff]
    %v515 = vld [vmem:[#allocation2 + $0xe38] sm:$0xff]
    %v516 = vld [vmem:[#allocation2 + $0xe40] sm:$0xff]
    %v517 = vld [vmem:[#allocation2 + $0xe48] sm:$0xff]
    %v518 = vld [vmem:[#allocation2 + $0xe50] sm:$0xff]
    %v519 = vld [vmem:[#allocation2 + $0xe58] sm:$0xff]
    %v520 = vld [vmem:[#allocation2 + $0xe60] sm:$0xff]
    %v521 = vld [vmem:[#allocation2 + $0xe68] sm:$0xff]
    %v522 = vld [vmem:[#allocation2 + $0xe70] sm:$0xff]
    %v523 = vld [vmem:[#allocation2 + $0xe78] sm:$0xff]
    %v524 = vld [vmem:[#allocation2 + $0xe80] sm:$0xff]
    %v525 = vld [vmem:[#allocation2 + $0xe88] sm:$0xff]
    %v526 = vld [vmem:[#allocation2 + $0xe90] sm:$0xff]
    %v527 = vld [vmem:[#allocation2 + $0xe98] sm:$0xff]
    %v528 = vld [vmem:[#allocation2 + $0xea0] sm:$0xff]
    %v529 = vld [vmem:[#allocation2 + $0xea8] sm:$0xff]
    %v530 = vld [vmem:[#allocation2 + $0xeb0] sm:$0xff]
    %v531 = vld [vmem:[#allocation2 + $0xeb8] sm:$0xff]
    %v532 = vld [vmem:[#allocation2 + $0xec0] sm:$0xff]
    %v533 = vld [vmem:[#allocation2 + $0xec8] sm:$0xff]
    %v534 = vld [vmem:[#allocation2 + $0xed0] sm:$0xff]
    %v535 = vld [vmem:[#allocation2 + $0xed8] sm:$0xff]
    %v536 = vld [vmem:[#allocation2 + $0xee0] sm:$0xff]
    %v537 = vld [vmem:[#allocation2 + $0xee8] sm:$0xff]
    %v538 = vld [vmem:[#allocation2 + $0xef0] sm:$0xff]
    %v539 = vld [vmem:[#allocation2 + $0xef8] sm:$0xff]
    %v540 = vld [vmem:[#allocation2 + $0xf00] sm:$0xff]
    %v541 = vld [vmem:[#allocation2 + $0xf08] sm:$0xff]
    %v542 = vld [vmem:[#allocation2 + $0xf10] sm:$0xff]
    %v543 = vld [vmem:[#allocation2 + $0xf18] sm:$0xff]
    %v544 = vld [vmem:[#allocation2 + $0xf20] sm:$0xff]
    %v545 = vld [vmem:[#allocation2 + $0xf28] sm:$0xff]
    %v546 = vld [vmem:[#allocation2 + $0xf30] sm:$0xff]
    %v547 = vld [vmem:[#allocation2 + $0xf38] sm:$0xff]
    %v548 = vld [vmem:[#allocation2 + $0xf40] sm:$0xff]
    %v549 = vld [vmem:[#allocation2 + $0xf48] sm:$0xff]
    %v550 = vld [vmem:[#allocation2 + $0xf50] sm:$0xff]
    %v551 = vld [vmem:[#allocation2 + $0xf58] sm:$0xff]
    %v552 = vld [vmem:[#allocation2 + $0xf60] sm:$0xff]
    %v553 = vld [vmem:[#allocation2 + $0xf68] sm:$0xff]
    %v554 = vld [vmem:[#allocation2 + $0xf70] sm:$0xff]
    %v555 = vld [vmem:[#allocation2 + $0xf78] sm:$0xff]
    %v556 = vld [vmem:[#allocation2 + $0xf80] sm:$0xff]
    %v557 = vld [vmem:[#allocation2 + $0xf88] sm:$0xff]
    %v558 = vld [vmem:[#allocation2 + $0xf90] sm:$0xff]
    %v559 = vld [vmem:[#allocation2 + $0xf98] sm:$0xff]
    %v560 = vld [vmem:[#allocation2 + $0xfa0] sm:$0xff]
    %v561 = vld [vmem:[#allocation2 + $0xfa8] sm:$0xff]
    %v562 = vld [vmem:[#allocation2 + $0xfb0] sm:$0xff]
    %v563 = vld [vmem:[#allocation2 + $0xfb8] sm:$0xff]
    %v564 = vld [vmem:[#allocation2 + $0xfc0] sm:$0xff]
    %v565 = vld [vmem:[#allocation2 + $0xfc8] sm:$0xff]
    %v566 = vld [vmem:[#allocation2 + $0xfd0] sm:$0xff]
    %v567 = vld [vmem:[#allocation2 + $0xfd8] sm:$0xff]
    %v568 = vld [vmem:[#allocation2 + $0xfe0] sm:$0xff]
    %v569 = vld [vmem:[#allocation2 + $0xfe8] sm:$0xff]
    %v570 = vld [vmem:[#allocation2 + $0xff0] sm:$0xff]
    %v571 = vld [vmem:[#allocation2 + $0xff8] sm:$0xff]
    %v572 = vld [vmem:[#allocation2 + $0x1000] sm:$0xff]
    %v573 = vld [vmem:[#allocation2 + $0x1008] sm:$0xff]
    %v574 = vld [vmem:[#allocation2 + $0x1010] sm:$0xff]
    %v575 = vld [vmem:[#allocation2 + $0x1018] sm:$0xff]
    %v576 = vld [vmem:[#allocation2 + $0x1020] sm:$0xff]
    %v577 = vld [vmem:[#allocation2 + $0x1028] sm:$0xff]
    %v578 = vld [vmem:[#allocation2 + $0x1030] sm:$0xff]
    %v579 = vld [vmem:[#allocation2 + $0x1038] sm:$0xff]
    %v580 = vld [vmem:[#allocation2 + $0x1040] sm:$0xff]
    %v581 = vld [vmem:[#allocation2 + $0x1048] sm:$0xff]
    %v582 = vld [vmem:[#allocation2 + $0x1050] sm:$0xff]
    %v583 = vld [vmem:[#allocation2 + $0x1058] sm:$0xff]
    %v584 = vld [vmem:[#allocation2 + $0x1060] sm:$0xff]
    %v585 = vld [vmem:[#allocation2 + $0x1068] sm:$0xff]
    %v586 = vld [vmem:[#allocation2 + $0x1070] sm:$0xff]
    %v587 = vld [vmem:[#allocation2 + $0x1078] sm:$0xff]
    %v588 = vld [vmem:[#allocation2 + $0x1080] sm:$0xff]
    %v589 = vld [vmem:[#allocation2 + $0x1088] sm:$0xff]
    %v590 = vld [vmem:[#allocation2 + $0x1090] sm:$0xff]
    %v591 = vld [vmem:[#allocation2 + $0x1098] sm:$0xff]
    %v592 = vld [vmem:[#allocation2 + $0x10a0] sm:$0xff]
    %v593 = vld [vmem:[#allocation2 + $0x10a8] sm:$0xff]
    %v594 = vld [vmem:[#allocation2 + $0x10b0] sm:$0xff]
    %v595 = vld [vmem:[#allocation2 + $0x10b8] sm:$0xff]
    %v596 = vld [vmem:[#allocation2 + $0x10c0] sm:$0xff]
    %v597 = vld [vmem:[#allocation2 + $0x10c8] sm:$0xff]
    %v598 = vld [vmem:[#allocation2 + $0x10d0] sm:$0xff]
    %v599 = vld [vmem:[#allocation2 + $0x10d8] sm:$0xff]
    %v600 = vld [vmem:[#allocation2 + $0x10e0] sm:$0xff]
    %v601 = vld [vmem:[#allocation2 + $0x10e8] sm:$0xff]
    %v602 = vld [vmem:[#allocation2 + $0x10f0] sm:$0xff]
    %v603 = vld [vmem:[#allocation2 + $0x10f8] sm:$0xff]
    %v604 = vld [vmem:[#allocation2 + $0x1100] sm:$0xff]
    %v605 = vld [vmem:[#allocation2 + $0x1108] sm:$0xff]
    %v606 = vld [vmem:[#allocation2 + $0x1110] sm:$0xff]
    %v607 = vld [vmem:[#allocation2 + $0x1118] sm:$0xff]
    %v608 = vld [vmem:[#allocation2 + $0x1120] sm:$0xff]
    %v609 = vld [vmem:[#allocation2 + $0x1128] sm:$0xff]
    %v610 = vld [vmem:[#allocation2 + $0x1130] sm:$0xff]
    %v611 = vld [vmem:[#allocation2 + $0x1138] sm:$0xff]
    %v612 = vld [vmem:[#allocation2 + $0x1140] sm:$0xff]
    %v613 = vld [vmem:[#allocation2 + $0x1148] sm:$0xff]
    %v614 = vld [vmem:[#allocation2 + $0x1150] sm:$0xff]
    %v615 = vld [vmem:[#allocation2 + $0x1158] sm:$0xff]
    %v616 = vld [vmem:[#allocation2 + $0x1160] sm:$0xff]
    %v617 = vld [vmem:[#allocation2 + $0x1168] sm:$0xff]
    %v618 = vld [vmem:[#allocation2 + $0x1170] sm:$0xff]
    %v619 = vld [vmem:[#allocation2 + $0x1178] sm:$0xff]
    %v620 = vld [vmem:[#allocation2 + $0x1180] sm:$0xff]
    %v621 = vld [vmem:[#allocation2 + $0x1188] sm:$0xff]
    %v622 = vld [vmem:[#allocation2 + $0x1190] sm:$0xff]
    %v623 = vld [vmem:[#allocation2 + $0x1198] sm:$0xff]
    %v624 = vld [vmem:[#allocation2 + $0x11a0] sm:$0xff]
    %v625 = vld [vmem:[#allocation2 + $0x11a8] sm:$0xff]
    %v626 = vld [vmem:[#allocation2 + $0x11b0] sm:$0xff]
    %v627 = vld [vmem:[#allocation2 + $0x11b8] sm:$0xff]
    %v628 = vld [vmem:[#allocation2 + $0x11c0] sm:$0xff]
    %v629 = vld [vmem:[#allocation2 + $0x11c8] sm:$0xff]
    %v630 = vld [vmem:[#allocation2 + $0x11d0] sm:$0xff]
    %v631 = vld [vmem:[#allocation2 + $0x11d8] sm:$0xff]
    %v632 = vld [vmem:[#allocation2 + $0x11e0] sm:$0xff]
    %v633 = vld [vmem:[#allocation2 + $0x11e8] sm:$0xff]
    %v634 = vld [vmem:[#allocation2 + $0x11f0] sm:$0xff]
    %v635 = vld [vmem:[#allocation2 + $0x11f8] sm:$0xff]
    %v636 = vld [vmem:[#allocation5] sm:$0x3f]
    %v638 = vlaneseq
    %v639 = vshrl.u32 %v638, 7
    %v640 = vsub.s32 0, %v639
    %v641 = vrot.slane %v636, %v640
    %v642 = vlaneseq
    %v643 = vshrl.u32 %v642, 7
    %v644 = vsub.s32 1, %v643
    %v645 = vrot.slane %v636, %v644
    %v646 = vlaneseq
    %v647 = vshrl.u32 %v646, 7
    %v648 = vsub.s32 2, %v647
    %v649 = vrot.slane %v636, %v648
    %v650 = vlaneseq
    %v651 = vshrl.u32 %v650, 7
    %v652 = vsub.s32 3, %v651
    %v653 = vrot.slane %v636, %v652
    %v654 = vlaneseq
    %v655 = vshrl.u32 %v654, 7
    %v656 = vsub.s32 4, %v655
    %v657 = vrot.slane %v636, %v656
    %v658 = vlaneseq
    %v659 = vshrl.u32 %v658, 7
    %v660 = vsub.s32 5, %v659
    %v661 = vrot.slane %v636, %v660
    %v670 = vcombine.high %v58, %v58
    %v672 = vunpack.c.l.s4 1983009808
    %v673 = vunpack.c.0.s8 %v672
    %v674 = vlaneseq
    %v675 = vshrl.u32 %v674, 7
    %v676 = vsub.s32 %v673, %v675
    %v677 = vrot.slane %v58, %v676
    %v679 = vunpack.c.l.s4 1983009808
    %v680 = vunpack.c.0.s8 %v679
    %v681 = vlaneseq
    %v682 = vshrl.u32 %v681, 7
    %v683 = vsub.s32 %v680, %v682
    %v684 = vrot.slane %v670, %v683
    %v685 = vcombine.high %v677, %v677
    %v686 = vcombine.high %v684, %v684
    %v688 = vunpack.c.l.s4 1983009808
    %v689 = vunpack.c.0.s8 %v688
    %v690 = vlaneseq
    %v691 = vshrl.u32 %v690, 7
    %v692 = vsub.s32 %v689, %v691
    %v693 = vrot.slane %v59, %v692
    %v694 = vcombine.high %v693, %v693
    %701 = vmatprep.subr.mxu0 %v61
    %702 = vmatpush1.msra.mxu0 %v60
    %703 = vmatprep.subr.mxu0 %v67
    %704 = vmatpush1.msra.mxu0 %v66
    %705 = vmatprep.subr.mxu0 %v73
    %706 = vmatpush1.msra.mxu0 %v72
    %707 = vmatprep.subr.mxu0 %v79
    %708 = vmatpush1.msra.mxu0 %v78
    %709 = vmatprep.subr.mxu0 %v85
    %710 = vmatpush1.msra.mxu0 %v84
    %711 = vmatprep.subr.mxu0 %v91
    %712 = vmatpush1.msra.mxu0 %v90
    %713 = vmatprep.subr.mxu0 %v97
    %714 = vmatpush1.msra.mxu0 %v96
    %715 = vmatprep.subr.mxu0 %v103
    %716 = vmatpush1.msra.mxu0 %v102
    %717 = vmatprep.subr.mxu0 %v109
    %718 = vmatpush1.msra.mxu0 %v108
    %719 = vmatprep.subr.mxu0 %v115
    %720 = vmatpush1.msra.mxu0 %v114
    %721 = vmatprep.subr.mxu0 %v121
    %722 = vmatpush1.msra.mxu0 %v120
    %723 = vmatprep.subr.mxu0 %v127
    %724 = vmatpush1.msra.mxu0 %v126
    %725 = vmatprep.subr.mxu0 %v133
    %726 = vmatpush1.msra.mxu0 %v132
    %727 = vmatprep.subr.mxu0 %v139
    %728 = vmatpush1.msra.mxu0 %v138
    %729 = vmatprep.subr.mxu0 %v145
    %730 = vmatpush1.msra.mxu0 %v144
    %731 = vmatprep.subr.mxu0 %v151
    %732 = vmatpush1.msra.mxu0 %v150
    %733 = vmatprep.subr.mxu0 %v157
    %734 = vmatpush1.msra.mxu0 %v156
    %735 = vmatprep.subr.mxu0 %v163
    %736 = vmatpush1.msra.mxu0 %v162
    %737 = vmatprep.subr.mxu0 %v169
    %738 = vmatpush1.msra.mxu0 %v168
    %739 = vmatprep.subr.mxu0 %v175
    %740 = vmatpush1.msra.mxu0 %v174
    %741 = vmatprep.subr.mxu0 %v181
    %742 = vmatpush1.msra.mxu0 %v180
    %743 = vmatprep.subr.mxu0 %v187
    %744 = vmatpush1.msra.mxu0 %v186
    %745 = vmatprep.subr.mxu0 %v193
    %746 = vmatpush1.msra.mxu0 %v192
    %747 = vmatprep.subr.mxu0 %v199
    %748 = vmatpush1.msra.mxu0 %v198
    %749 = vmatprep.subr.mxu0 %v205
    %750 = vmatpush1.msra.mxu0 %v204
    %751 = vmatprep.subr.mxu0 %v211
    %752 = vmatpush1.msra.mxu0 %v210
    %753 = vmatprep.subr.mxu0 %v217
    %754 = vmatpush1.msra.mxu0 %v216
    %755 = vmatprep.subr.mxu0 %v223
    %756 = vmatpush1.msra.mxu0 %v222
    %757 = vmatprep.subr.mxu0 %v229
    %758 = vmatpush1.msra.mxu0 %v228
    %759 = vmatprep.subr.mxu0 %v235
    %760 = vmatpush1.msra.mxu0 %v234
    %761 = vmatprep.subr.mxu0 %v241
    %762 = vmatpush1.msra.mxu0 %v240
    %763 = vmatprep.subr.mxu0 %v247
    %764 = vmatpush1.msra.mxu0 %v246
    %765 = vmatprep.mubr.f32.mxu0 %v685
    %766 = vmatmul.mubr.f32.gmra.mrb[0].mxu0 %v677
    %v767 = vpop.f32.mrb[0].mxu0
    %v768 = vadd.f32 %v641, %v767
    %v769 = vpop.f32.mrb[0].mxu0
    %v770 = vadd.f32 %v645, %v769
    %771 = vdwg.mxu0
    %772 = vmatprep.subr.mxu0 %v253
    %773 = vmatpush1.msra.mxu0 %v252
    %774 = vmatprep.subr.mxu0 %v259
    %775 = vmatpush1.msra.mxu0 %v258
    %776 = vmatprep.subr.mxu0 %v265
    %777 = vmatpush1.msra.mxu0 %v264
    %778 = vmatprep.subr.mxu0 %v271
    %779 = vmatpush1.msra.mxu0 %v270
    %780 = vmatprep.subr.mxu0 %v277
    %781 = vmatpush1.msra.mxu0 %v276
    %782 = vmatprep.subr.mxu0 %v283
    %783 = vmatpush1.msra.mxu0 %v282
    %784 = vmatprep.subr.mxu0 %v289
    %785 = vmatpush1.msra.mxu0 %v288
    %786 = vmatprep.subr.mxu0 %v295
    %787 = vmatpush1.msra.mxu0 %v294
    %788 = vmatprep.subr.mxu0 %v301
    %789 = vmatpush1.msra.mxu0 %v300
    %790 = vmatprep.subr.mxu0 %v307
    %791 = vmatpush1.msra.mxu0 %v306
    %792 = vmatprep.subr.mxu0 %v313
    %793 = vmatpush1.msra.mxu0 %v312
    %794 = vmatprep.subr.mxu0 %v319
    %795 = vmatpush1.msra.mxu0 %v318
    %796 = vmatprep.subr.mxu0 %v325
    %797 = vmatpush1.msra.mxu0 %v324
    %798 = vmatprep.subr.mxu0 %v331
    %799 = vmatpush1.msra.mxu0 %v330
    %800 = vmatprep.subr.mxu0 %v337
    %801 = vmatpush1.msra.mxu0 %v336
    %802 = vmatprep.subr.mxu0 %v343
    %803 = vmatpush1.msra.mxu0 %v342
    %804 = vmatprep.subr.mxu0 %v349
    %805 = vmatpush1.msra.mxu0 %v348
    %806 = vmatprep.subr.mxu0 %v355
    %807 = vmatpush1.msra.mxu0 %v354
    %808 = vmatprep.subr.mxu0 %v361
    %809 = vmatpush1.msra.mxu0 %v360
    %810 = vmatprep.subr.mxu0 %v367
    %811 = vmatpush1.msra.mxu0 %v366
    %812 = vmatprep.subr.mxu0 %v373
    %813 = vmatpush1.msra.mxu0 %v372
    %814 = vmatprep.subr.mxu0 %v379
    %815 = vmatpush1.msra.mxu0 %v378
    %816 = vmatprep.subr.mxu0 %v385
    %817 = vmatpush1.msra.mxu0 %v384
    %818 = vmatprep.subr.mxu0 %v391
    %819 = vmatpush1.msra.mxu0 %v390
    %820 = vmatprep.subr.mxu0 %v397
    %821 = vmatpush1.msra.mxu0 %v396
    %822 = vmatprep.subr.mxu0 %v403
    %823 = vmatpush1.msra.mxu0 %v402
    %824 = vmatprep.subr.mxu0 %v409
    %825 = vmatpush1.msra.mxu0 %v408
    %826 = vmatprep.subr.mxu0 %v415
    %827 = vmatpush1.msra.mxu0 %v414
    %828 = vmatprep.subr.mxu0 %v421
    %829 = vmatpush1.msra.mxu0 %v420
    %830 = vmatprep.subr.mxu0 %v427
    %831 = vmatpush1.msra.mxu0 %v426
    %832 = vmatprep.subr.mxu0 %v433
    %833 = vmatpush1.msra.mxu0 %v432
    %834 = vmatprep.subr.mxu0 %v439
    %835 = vmatpush1.msra.mxu0 %v438
    %836 = vmatprep.mubr.f32.mxu0 %v686
    %837 = vmatmul.mubr.f32.gmra.mrb[0].mxu0 %v684
    %v838 = vpop.f32.mrb[0].mxu0
    %v839 = vadd.f32 %v768, %v838
    %v840 = vpop.f32.mrb[0].mxu0
    %v841 = vadd.f32 %v770, %v840
    %842 = vdwg.mxu0
    %843 = vmatprep.subr.mxu0 %v445
    %844 = vmatpush1.msra.mxu0 %v444
    %845 = vmatprep.subr.mxu0 %v451
    %846 = vmatpush1.msra.mxu0 %v450
    %847 = vmatprep.subr.mxu0 %v457
    %848 = vmatpush1.msra.mxu0 %v456
    %849 = vmatprep.subr.mxu0 %v463
    %850 = vmatpush1.msra.mxu0 %v462
    %851 = vmatprep.subr.mxu0 %v469
    %852 = vmatpush1.msra.mxu0 %v468
    %853 = vmatprep.subr.mxu0 %v475
    %854 = vmatpush1.msra.mxu0 %v474
    %855 = vmatprep.subr.mxu0 %v481
    %856 = vmatpush1.msra.mxu0 %v480
    %857 = vmatprep.subr.mxu0 %v487
    %858 = vmatpush1.msra.mxu0 %v486
    %859 = vmatprep.subr.mxu0 %v493
    %860 = vmatpush1.msra.mxu0 %v492
    %861 = vmatprep.subr.mxu0 %v499
    %862 = vmatpush1.msra.mxu0 %v498
    %863 = vmatprep.subr.mxu0 %v505
    %864 = vmatpush1.msra.mxu0 %v504
    %865 = vmatprep.subr.mxu0 %v511
    %866 = vmatpush1.msra.mxu0 %v510
    %867 = vmatprep.subr.mxu0 %v517
    %868 = vmatpush1.msra.mxu0 %v516
    %869 = vmatprep.subr.mxu0 %v523
    %870 = vmatpush1.msra.mxu0 %v522
    %871 = vmatprep.subr.mxu0 %v529
    %872 = vmatpush1.msra.mxu0 %v528
    %873 = vmatprep.subr.mxu0 %v535
    %874 = vmatpush1.msra.mxu0 %v534
    %875 = vmatprep.subr.mxu0 %v541
    %876 = vmatpush1.msra.mxu0 %v540
    %877 = vmatprep.subr.mxu0 %v547
    %878 = vmatpush1.msra.mxu0 %v546
    %879 = vmatprep.subr.mxu0 %v553
    %880 = vmatpush1.msra.mxu0 %v552
    %881 = vmatprep.subr.mxu0 %v559
    %882 = vmatpush1.msra.mxu0 %v558
    %883 = vmatprep.subr.mxu0 %v565
    %884 = vmatpush1.msra.mxu0 %v564
    %885 = vmatprep.subr.mxu0 %v571
    %886 = vmatpush1.msra.mxu0 %v570
    %887 = vmatprep.subr.mxu0 %v577
    %888 = vmatpush1.msra.mxu0 %v576
    %889 = vmatprep.subr.mxu0 %v583
    %890 = vmatpush1.msra.mxu0 %v582
    %891 = vmatprep.subr.mxu0 %v589
    %892 = vmatpush1.msra.mxu0 %v588
    %893 = vmatprep.subr.mxu0 %v595
    %894 = vmatpush1.msra.mxu0 %v594
    %895 = vmatprep.subr.mxu0 %v601
    %896 = vmatpush1.msra.mxu0 %v600
    %897 = vmatprep.subr.mxu0 %v607
    %898 = vmatpush1.msra.mxu0 %v606
    %899 = vmatprep.subr.mxu0 %v613
    %900 = vmatpush1.msra.mxu0 %v612
    %901 = vmatprep.subr.mxu0 %v619
    %902 = vmatpush1.msra.mxu0 %v618
    %903 = vmatprep.subr.mxu0 %v625
    %904 = vmatpush1.msra.mxu0 %v624
    %905 = vmatprep.subr.mxu0 %v631
    %906 = vmatpush1.msra.mxu0 %v630
    %907 = vmatprep.mubr.f32.mxu0 %v694
    %908 = vmatmul.mubr.f32.gmra.mrb[0].mxu0 %v693
    %v909 = vpop.f32.mrb[0].mxu0
    %v910 = vadd.f32 %v839, %v909
    %v911 = vpop.f32.mrb[0].mxu0
    %v912 = vadd.f32 %v841, %v911
    %913 = vdwg.mxu0
    %914 = vmatprep.subr.mxu0 %v63
    %915 = vmatpush1.msra.mxu0 %v62
    %916 = vmatprep.subr.mxu0 %v69
    %917 = vmatpush1.msra.mxu0 %v68
    %918 = vmatprep.subr.mxu0 %v75
    %919 = vmatpush1.msra.mxu0 %v74
    %920 = vmatprep.subr.mxu0 %v81
    %921 = vmatpush1.msra.mxu0 %v80
    %922 = vmatprep.subr.mxu0 %v87
    %923 = vmatpush1.msra.mxu0 %v86
    %924 = vmatprep.subr.mxu0 %v93
    %925 = vmatpush1.msra.mxu0 %v92
    %926 = vmatprep.subr.mxu0 %v99
    %927 = vmatpush1.msra.mxu0 %v98
    %928 = vmatprep.subr.mxu0 %v105
    %929 = vmatpush1.msra.mxu0 %v104
    %930 = vmatprep.subr.mxu0 %v111
    %931 = vmatpush1.msra.mxu0 %v110
    %932 = vmatprep.subr.mxu0 %v117
    %933 = vmatpush1.msra.mxu0 %v116
    %934 = vmatprep.subr.mxu0 %v123
    %935 = vmatpush1.msra.mxu0 %v122
    %936 = vmatprep.subr.mxu0 %v129
    %937 = vmatpush1.msra.mxu0 %v128
    %938 = vmatprep.subr.mxu0 %v135
    %939 = vmatpush1.msra.mxu0 %v134
    %940 = vmatprep.subr.mxu0 %v141
    %941 = vmatpush1.msra.mxu0 %v140
    %942 = vmatprep.subr.mxu0 %v147
    %943 = vmatpush1.msra.mxu0 %v146
    %944 = vmatprep.subr.mxu0 %v153
    %945 = vmatpush1.msra.mxu0 %v152
    %946 = vmatprep.subr.mxu0 %v159
    %947 = vmatpush1.msra.mxu0 %v158
    %948 = vmatprep.subr.mxu0 %v165
    %949 = vmatpush1.msra.mxu0 %v164
    %950 = vmatprep.subr.mxu0 %v171
    %951 = vmatpush1.msra.mxu0 %v170
    %952 = vmatprep.subr.mxu0 %v177
    %953 = vmatpush1.msra.mxu0 %v176
    %954 = vmatprep.subr.mxu0 %v183
    %955 = vmatpush1.msra.mxu0 %v182
    %956 = vmatprep.subr.mxu0 %v189
    %957 = vmatpush1.msra.mxu0 %v188
    %958 = vmatprep.subr.mxu0 %v195
    %959 = vmatpush1.msra.mxu0 %v194
    %960 = vmatprep.subr.mxu0 %v201
    %961 = vmatpush1.msra.mxu0 %v200
    %962 = vmatprep.subr.mxu0 %v207
    %963 = vmatpush1.msra.mxu0 %v206
    %964 = vmatprep.subr.mxu0 %v213
    %965 = vmatpush1.msra.mxu0 %v212
    %966 = vmatprep.subr.mxu0 %v219
    %967 = vmatpush1.msra.mxu0 %v218
    %968 = vmatprep.subr.mxu0 %v225
    %969 = vmatpush1.msra.mxu0 %v224
    %970 = vmatprep.subr.mxu0 %v231
    %971 = vmatpush1.msra.mxu0 %v230
    %972 = vmatprep.subr.mxu0 %v237
    %973 = vmatpush1.msra.mxu0 %v236
    %974 = vmatprep.subr.mxu0 %v243
    %975 = vmatpush1.msra.mxu0 %v242
    %976 = vmatprep.subr.mxu0 %v249
    %977 = vmatpush1.msra.mxu0 %v248
    %978 = vmatprep.mubr.f32.mxu0 %v685
    %979 = vmatmul.mubr.f32.gmra.mrb[0].mxu0 %v677
    %v980 = vpop.f32.mrb[0].mxu0
    %v981 = vadd.f32 %v649, %v980
    %v982 = vpop.f32.mrb[0].mxu0
    %v983 = vadd.f32 %v653, %v982
    %984 = vdwg.mxu0
    %985 = vmatprep.subr.mxu0 %v255
    %986 = vmatpush1.msra.mxu0 %v254
    %987 = vmatprep.subr.mxu0 %v261
    %988 = vmatpush1.msra.mxu0 %v260
    %989 = vmatprep.subr.mxu0 %v267
    %990 = vmatpush1.msra.mxu0 %v266
    %991 = vmatprep.subr.mxu0 %v273
    %992 = vmatpush1.msra.mxu0 %v272
    %993 = vmatprep.subr.mxu0 %v279
    %994 = vmatpush1.msra.mxu0 %v278
    %995 = vmatprep.subr.mxu0 %v285
    %996 = vmatpush1.msra.mxu0 %v284
    %997 = vmatprep.subr.mxu0 %v291
    %998 = vmatpush1.msra.mxu0 %v290
    %999 = vmatprep.subr.mxu0 %v297
    %1000 = vmatpush1.msra.mxu0 %v296
    %1001 = vmatprep.subr.mxu0 %v303
    %1002 = vmatpush1.msra.mxu0 %v302
    %1003 = vmatprep.subr.mxu0 %v309
    %1004 = vmatpush1.msra.mxu0 %v308
    %1005 = vmatprep.subr.mxu0 %v315
    %1006 = vmatpush1.msra.mxu0 %v314
    %1007 = vmatprep.subr.mxu0 %v321
    %1008 = vmatpush1.msra.mxu0 %v320
    %1009 = vmatprep.subr.mxu0 %v327
    %1010 = vmatpush1.msra.mxu0 %v326
    %1011 = vmatprep.subr.mxu0 %v333
    %1012 = vmatpush1.msra.mxu0 %v332
    %1013 = vmatprep.subr.mxu0 %v339
    %1014 = vmatpush1.msra.mxu0 %v338
    %1015 = vmatprep.subr.mxu0 %v345
    %1016 = vmatpush1.msra.mxu0 %v344
    %1017 = vmatprep.subr.mxu0 %v351
    %1018 = vmatpush1.msra.mxu0 %v350
    %1019 = vmatprep.subr.mxu0 %v357
    %1020 = vmatpush1.msra.mxu0 %v356
    %1021 = vmatprep.subr.mxu0 %v363
    %1022 = vmatpush1.msra.mxu0 %v362
    %1023 = vmatprep.subr.mxu0 %v369
    %1024 = vmatpush1.msra.mxu0 %v368
    %1025 = vmatprep.subr.mxu0 %v375
    %1026 = vmatpush1.msra.mxu0 %v374
    %1027 = vmatprep.subr.mxu0 %v381
    %1028 = vmatpush1.msra.mxu0 %v380
    %1029 = vmatprep.subr.mxu0 %v387
    %1030 = vmatpush1.msra.mxu0 %v386
    %1031 = vmatprep.subr.mxu0 %v393
    %1032 = vmatpush1.msra.mxu0 %v392
    %1033 = vmatprep.subr.mxu0 %v399
    %1034 = vmatpush1.msra.mxu0 %v398
    %1035 = vmatprep.subr.mxu0 %v405
    %1036 = vmatpush1.msra.mxu0 %v404
    %1037 = vmatprep.subr.mxu0 %v411
    %1038 = vmatpush1.msra.mxu0 %v410
    %1039 = vmatprep.subr.mxu0 %v417
    %1040 = vmatpush1.msra.mxu0 %v416
    %1041 = vmatprep.subr.mxu0 %v423
    %1042 = vmatpush1.msra.mxu0 %v422
    %1043 = vmatprep.subr.mxu0 %v429
    %1044 = vmatpush1.msra.mxu0 %v428
    %1045 = vmatprep.subr.mxu0 %v435
    %1046 = vmatpush1.msra.mxu0 %v434
    %1047 = vmatprep.subr.mxu0 %v441
    %1048 = vmatpush1.msra.mxu0 %v440
    %1049 = vmatprep.mubr.f32.mxu0 %v686
    %1050 = vmatmul.mubr.f32.gmra.mrb[0].mxu0 %v684
    %v1051 = vpop.f32.mrb[0].mxu0
    %v1052 = vadd.f32 %v981, %v1051
    %v1053 = vpop.f32.mrb[0].mxu0
    %v1054 = vadd.f32 %v983, %v1053
    %1055 = vdwg.mxu0
    %1056 = vmatprep.subr.mxu0 %v447
    %1057 = vmatpush1.msra.mxu0 %v446
    %1058 = vmatprep.subr.mxu0 %v453
    %1059 = vmatpush1.msra.mxu0 %v452
    %1060 = vmatprep.subr.mxu0 %v459
    %1061 = vmatpush1.msra.mxu0 %v458
    %1062 = vmatprep.subr.mxu0 %v465
    %1063 = vmatpush1.msra.mxu0 %v464
    %1064 = vmatprep.subr.mxu0 %v471
    %1065 = vmatpush1.msra.mxu0 %v470
    %1066 = vmatprep.subr.mxu0 %v477
    %1067 = vmatpush1.msra.mxu0 %v476
    %1068 = vmatprep.subr.mxu0 %v483
    %1069 = vmatpush1.msra.mxu0 %v482
    %1070 = vmatprep.subr.mxu0 %v489
    %1071 = vmatpush1.msra.mxu0 %v488
    %1072 = vmatprep.subr.mxu0 %v495
    %1073 = vmatpush1.msra.mxu0 %v494
    %1074 = vmatprep.subr.mxu0 %v501
    %1075 = vmatpush1.msra.mxu0 %v500
    %1076 = vmatprep.subr.mxu0 %v507
    %1077 = vmatpush1.msra.mxu0 %v506
    %1078 = vmatprep.subr.mxu0 %v513
    %1079 = vmatpush1.msra.mxu0 %v512
    %1080 = vmatprep.subr.mxu0 %v519
    %1081 = vmatpush1.msra.mxu0 %v518
    %1082 = vmatprep.subr.mxu0 %v525
    %1083 = vmatpush1.msra.mxu0 %v524
    %1084 = vmatprep.subr.mxu0 %v531
    %1085 = vmatpush1.msra.mxu0 %v530
    %1086 = vmatprep.subr.mxu0 %v537
    %1087 = vmatpush1.msra.mxu0 %v536
    %1088 = vmatprep.subr.mxu0 %v543
    %1089 = vmatpush1.msra.mxu0 %v542
    %1090 = vmatprep.subr.mxu0 %v549
    %1091 = vmatpush1.msra.mxu0 %v548
    %1092 = vmatprep.subr.mxu0 %v555
    %1093 = vmatpush1.msra.mxu0 %v554
    %1094 = vmatprep.subr.mxu0 %v561
    %1095 = vmatpush1.msra.mxu0 %v560
    %1096 = vmatprep.subr.mxu0 %v567
    %1097 = vmatpush1.msra.mxu0 %v566
    %1098 = vmatprep.subr.mxu0 %v573
    %1099 = vmatpush1.msra.mxu0 %v572
    %1100 = vmatprep.subr.mxu0 %v579
    %1101 = vmatpush1.msra.mxu0 %v578
    %1102 = vmatprep.subr.mxu0 %v585
    %1103 = vmatpush1.msra.mxu0 %v584
    %1104 = vmatprep.subr.mxu0 %v591
    %1105 = vmatpush1.msra.mxu0 %v590
    %1106 = vmatprep.subr.mxu0 %v597
    %1107 = vmatpush1.msra.mxu0 %v596
    %1108 = vmatprep.subr.mxu0 %v603
    %1109 = vmatpush1.msra.mxu0 %v602
    %1110 = vmatprep.subr.mxu0 %v609
    %1111 = vmatpush1.msra.mxu0 %v608
    %1112 = vmatprep.subr.mxu0 %v615
    %1113 = vmatpush1.msra.mxu0 %v614
    %1114 = vmatprep.subr.mxu0 %v621
    %1115 = vmatpush1.msra.mxu0 %v620
    %1116 = vmatprep.subr.mxu0 %v627
    %1117 = vmatpush1.msra.mxu0 %v626
    %1118 = vmatprep.subr.mxu0 %v633
    %1119 = vmatpush1.msra.mxu0 %v632
    %1120 = vmatprep.mubr.f32.mxu0 %v694
    %1121 = vmatmul.mubr.f32.gmra.mrb[0].mxu0 %v693
    %v1122 = vpop.f32.mrb[0].mxu0
    %v1123 = vadd.f32 %v1052, %v1122
    %v1124 = vpop.f32.mrb[0].mxu0
    %v1125 = vadd.f32 %v1054, %v1124
    %1126 = vdwg.mxu0
    %1127 = vmatprep.subr.mxu0 %v65
    %1128 = vmatpush1.msra.mxu0 %v64
    %1129 = vmatprep.subr.mxu0 %v71
    %1130 = vmatpush1.msra.mxu0 %v70
    %1131 = vmatprep.subr.mxu0 %v77
    %1132 = vmatpush1.msra.mxu0 %v76
    %1133 = vmatprep.subr.mxu0 %v83
    %1134 = vmatpush1.msra.mxu0 %v82
    %1135 = vmatprep.subr.mxu0 %v89
    %1136 = vmatpush1.msra.mxu0 %v88
    %1137 = vmatprep.subr.mxu0 %v95
    %1138 = vmatpush1.msra.mxu0 %v94
    %1139 = vmatprep.subr.mxu0 %v101
    %1140 = vmatpush1.msra.mxu0 %v100
    %1141 = vmatprep.subr.mxu0 %v107
    %1142 = vmatpush1.msra.mxu0 %v106
    %1143 = vmatprep.subr.mxu0 %v113
    %1144 = vmatpush1.msra.mxu0 %v112
    %1145 = vmatprep.subr.mxu0 %v119
    %1146 = vmatpush1.msra.mxu0 %v118
    %1147 = vmatprep.subr.mxu0 %v125
    %1148 = vmatpush1.msra.mxu0 %v124
    %1149 = vmatprep.subr.mxu0 %v131
    %1150 = vmatpush1.msra.mxu0 %v130
    %1151 = vmatprep.subr.mxu0 %v137
    %1152 = vmatpush1.msra.mxu0 %v136
    %1153 = vmatprep.subr.mxu0 %v143
    %1154 = vmatpush1.msra.mxu0 %v142
    %1155 = vmatprep.subr.mxu0 %v149
    %1156 = vmatpush1.msra.mxu0 %v148
    %1157 = vmatprep.subr.mxu0 %v155
    %1158 = vmatpush1.msra.mxu0 %v154
    %1159 = vmatprep.subr.mxu0 %v161
    %1160 = vmatpush1.msra.mxu0 %v160
    %1161 = vmatprep.subr.mxu0 %v167
    %1162 = vmatpush1.msra.mxu0 %v166
    %1163 = vmatprep.subr.mxu0 %v173
    %1164 = vmatpush1.msra.mxu0 %v172
    %1165 = vmatprep.subr.mxu0 %v179
    %1166 = vmatpush1.msra.mxu0 %v178
    %1167 = vmatprep.subr.mxu0 %v185
    %1168 = vmatpush1.msra.mxu0 %v184
    %1169 = vmatprep.subr.mxu0 %v191
    %1170 = vmatpush1.msra.mxu0 %v190
    %1171 = vmatprep.subr.mxu0 %v197
    %1172 = vmatpush1.msra.mxu0 %v196
    %1173 = vmatprep.subr.mxu0 %v203
    %1174 = vmatpush1.msra.mxu0 %v202
    %1175 = vmatprep.subr.mxu0 %v209
    %1176 = vmatpush1.msra.mxu0 %v208
    %1177 = vmatprep.subr.mxu0 %v215
    %1178 = vmatpush1.msra.mxu0 %v214
    %1179 = vmatprep.subr.mxu0 %v221
    %1180 = vmatpush1.msra.mxu0 %v220
    %1181 = vmatprep.subr.mxu0 %v227
    %1182 = vmatpush1.msra.mxu0 %v226
    %1183 = vmatprep.subr.mxu0 %v233
    %1184 = vmatpush1.msra.mxu0 %v232
    %1185 = vmatprep.subr.mxu0 %v239
    %1186 = vmatpush1.msra.mxu0 %v238
    %1187 = vmatprep.subr.mxu0 %v245
    %1188 = vmatpush1.msra.mxu0 %v244
    %1189 = vmatprep.subr.mxu0 %v251
    %1190 = vmatpush1.msra.mxu0 %v250
    %1191 = vmatprep.mubr.f32.mxu0 %v685
    %1192 = vmatmul.mubr.f32.gmra.mrb[0].mxu0 %v677
    %v1193 = vpop.f32.mrb[0].mxu0
    %v1194 = vadd.f32 %v657, %v1193
    %v1195 = vpop.f32.mrb[0].mxu0
    %v1196 = vadd.f32 %v661, %v1195
    %1197 = vdwg.mxu0
    %1198 = vmatprep.subr.mxu0 %v257
    %1199 = vmatpush1.msra.mxu0 %v256
    %1200 = vmatprep.subr.mxu0 %v263
    %1201 = vmatpush1.msra.mxu0 %v262
    %1202 = vmatprep.subr.mxu0 %v269
    %1203 = vmatpush1.msra.mxu0 %v268
    %1204 = vmatprep.subr.mxu0 %v275
    %1205 = vmatpush1.msra.mxu0 %v274
    %1206 = vmatprep.subr.mxu0 %v281
    %1207 = vmatpush1.msra.mxu0 %v280
    %1208 = vmatprep.subr.mxu0 %v287
    %1209 = vmatpush1.msra.mxu0 %v286
    %1210 = vmatprep.subr.mxu0 %v293
    %1211 = vmatpush1.msra.mxu0 %v292
    %1212 = vmatprep.subr.mxu0 %v299
    %1213 = vmatpush1.msra.mxu0 %v298
    %1214 = vmatprep.subr.mxu0 %v305
    %1215 = vmatpush1.msra.mxu0 %v304
    %1216 = vmatprep.subr.mxu0 %v311
    %1217 = vmatpush1.msra.mxu0 %v310
    %1218 = vmatprep.subr.mxu0 %v317
    %1219 = vmatpush1.msra.mxu0 %v316
    %1220 = vmatprep.subr.mxu0 %v323
    %1221 = vmatpush1.msra.mxu0 %v322
    %1222 = vmatprep.subr.mxu0 %v329
    %1223 = vmatpush1.msra.mxu0 %v328
    %1224 = vmatprep.subr.mxu0 %v335
    %1225 = vmatpush1.msra.mxu0 %v334
    %1226 = vmatprep.subr.mxu0 %v341
    %1227 = vmatpush1.msra.mxu0 %v340
    %1228 = vmatprep.subr.mxu0 %v347
    %1229 = vmatpush1.msra.mxu0 %v346
    %1230 = vmatprep.subr.mxu0 %v353
    %1231 = vmatpush1.msra.mxu0 %v352
    %1232 = vmatprep.subr.mxu0 %v359
    %1233 = vmatpush1.msra.mxu0 %v358
    %1234 = vmatprep.subr.mxu0 %v365
    %1235 = vmatpush1.msra.mxu0 %v364
    %1236 = vmatprep.subr.mxu0 %v371
    %1237 = vmatpush1.msra.mxu0 %v370
    %1238 = vmatprep.subr.mxu0 %v377
    %1239 = vmatpush1.msra.mxu0 %v376
    %1240 = vmatprep.subr.mxu0 %v383
    %1241 = vmatpush1.msra.mxu0 %v382
    %1242 = vmatprep.subr.mxu0 %v389
    %1243 = vmatpush1.msra.mxu0 %v388
    %1244 = vmatprep.subr.mxu0 %v395
    %1245 = vmatpush1.msra.mxu0 %v394
    %1246 = vmatprep.subr.mxu0 %v401
    %1247 = vmatpush1.msra.mxu0 %v400
    %1248 = vmatprep.subr.mxu0 %v407
    %1249 = vmatpush1.msra.mxu0 %v406
    %1250 = vmatprep.subr.mxu0 %v413
    %1251 = vmatpush1.msra.mxu0 %v412
    %1252 = vmatprep.subr.mxu0 %v419
    %1253 = vmatpush1.msra.mxu0 %v418
    %1254 = vmatprep.subr.mxu0 %v425
    %1255 = vmatpush1.msra.mxu0 %v424
    %1256 = vmatprep.subr.mxu0 %v431
    %1257 = vmatpush1.msra.mxu0 %v430
    %1258 = vmatprep.subr.mxu0 %v437
    %1259 = vmatpush1.msra.mxu0 %v436
    %1260 = vmatprep.subr.mxu0 %v443
    %1261 = vmatpush1.msra.mxu0 %v442
    %1262 = vmatprep.mubr.f32.mxu0 %v686
    %1263 = vmatmul.mubr.f32.gmra.mrb[0].mxu0 %v684
    %v1264 = vpop.f32.mrb[0].mxu0
    %v1265 = vadd.f32 %v1194, %v1264
    %v1266 = vpop.f32.mrb[0].mxu0
    %v1267 = vadd.f32 %v1196, %v1266
    %1268 = vdwg.mxu0
    %1269 = vmatprep.subr.mxu0 %v449
    %1270 = vmatpush1.msra.mxu0 %v448
    %1271 = vmatprep.subr.mxu0 %v455
    %1272 = vmatpush1.msra.mxu0 %v454
    %1273 = vmatprep.subr.mxu0 %v461
    %1274 = vmatpush1.msra.mxu0 %v460
    %1275 = vmatprep.subr.mxu0 %v467
    %1276 = vmatpush1.msra.mxu0 %v466
    %1277 = vmatprep.subr.mxu0 %v473
    %1278 = vmatpush1.msra.mxu0 %v472
    %1279 = vmatprep.subr.mxu0 %v479
    %1280 = vmatpush1.msra.mxu0 %v478
    %1281 = vmatprep.subr.mxu0 %v485
    %1282 = vmatpush1.msra.mxu0 %v484
    %1283 = vmatprep.subr.mxu0 %v491
    %1284 = vmatpush1.msra.mxu0 %v490
    %1285 = vmatprep.subr.mxu0 %v497
    %1286 = vmatpush1.msra.mxu0 %v496
    %1287 = vmatprep.subr.mxu0 %v503
    %1288 = vmatpush1.msra.mxu0 %v502
    %1289 = vmatprep.subr.mxu0 %v509
    %1290 = vmatpush1.msra.mxu0 %v508
    %1291 = vmatprep.subr.mxu0 %v515
    %1292 = vmatpush1.msra.mxu0 %v514
    %1293 = vmatprep.subr.mxu0 %v521
    %1294 = vmatpush1.msra.mxu0 %v520
    %1295 = vmatprep.subr.mxu0 %v527
    %1296 = vmatpush1.msra.mxu0 %v526
    %1297 = vmatprep.subr.mxu0 %v533
    %1298 = vmatpush1.msra.mxu0 %v532
    %1299 = vmatprep.subr.mxu0 %v539
    %1300 = vmatpush1.msra.mxu0 %v538
    %1301 = vmatprep.subr.mxu0 %v545
    %1302 = vmatpush1.msra.mxu0 %v544
    %1303 = vmatprep.subr.mxu0 %v551
    %1304 = vmatpush1.msra.mxu0 %v550
    %1305 = vmatprep.subr.mxu0 %v557
    %1306 = vmatpush1.msra.mxu0 %v556
    %1307 = vmatprep.subr.mxu0 %v563
    %1308 = vmatpush1.msra.mxu0 %v562
    %1309 = vmatprep.subr.mxu0 %v569
    %1310 = vmatpush1.msra.mxu0 %v568
    %1311 = vmatprep.subr.mxu0 %v575
    %1312 = vmatpush1.msra.mxu0 %v574
    %1313 = vmatprep.subr.mxu0 %v581
    %1314 = vmatpush1.msra.mxu0 %v580
    %1315 = vmatprep.subr.mxu0 %v587
    %1316 = vmatpush1.msra.mxu0 %v586
    %1317 = vmatprep.subr.mxu0 %v593
    %1318 = vmatpush1.msra.mxu0 %v592
    %1319 = vmatprep.subr.mxu0 %v599
    %1320 = vmatpush1.msra.mxu0 %v598
    %1321 = vmatprep.subr.mxu0 %v605
    %1322 = vmatpush1.msra.mxu0 %v604
    %1323 = vmatprep.subr.mxu0 %v611
    %1324 = vmatpush1.msra.mxu0 %v610
    %1325 = vmatprep.subr.mxu0 %v617
    %1326 = vmatpush1.msra.mxu0 %v616
    %1327 = vmatprep.subr.mxu0 %v623
    %1328 = vmatpush1.msra.mxu0 %v622
    %1329 = vmatprep.subr.mxu0 %v629
    %1330 = vmatpush1.msra.mxu0 %v628
    %1331 = vmatprep.subr.mxu0 %v635
    %1332 = vmatpush1.msra.mxu0 %v634
    %1333 = vmatprep.mubr.f32.mxu0 %v694
    %1334 = vmatmul.mubr.f32.gmra.mrb[0].mxu0 %v693
    %v1335 = vpop.f32.mrb[0].mxu0
    %v1336 = vadd.f32 %v1265, %v1335
    %v1337 = vpop.f32.mrb[0].mxu0
    %v1338 = vadd.f32 %v1267, %v1337
    %1339 = vdwg.mxu0
    %1340 = vrot.lane.b32.xlu0 %v910, 127
    %v1341 = vpop.permute.xlu0 %1340
    %1342 = vrot.lane.b32.xlu0 %v912, 127
    %v1343 = vpop.permute.xlu0 %1342
    %1344 = vrot.lane.b32.xlu0 %v1123, 127
    %v1345 = vpop.permute.xlu0 %1344
    %1346 = vrot.lane.b32.xlu0 %v1125, 127
    %v1347 = vpop.permute.xlu0 %1346
    %1348 = vrot.lane.b32.xlu0 %v1336, 127
    %v1349 = vpop.permute.xlu0 %1348
    %1350 = vrot.lane.b32.xlu0 %v1338, 127
    %v1351 = vpop.permute.xlu0 %1350
    %v1352 = vlaneseq
    %v1353 = vand.u32 %v1352, 127
    %vm1354 = vcmp.lt.s32.totalorder %v1353, 127
    %v1355 = vsel %vm1354, %v1349, %v1351
    %v1356 = vsel %vm1354, %v1347, %v1349
    %v1357 = vsel %vm1354, %v1345, %v1347
    %v1358 = vsel %vm1354, %v1343, %v1345
    %v1359 = vsel %vm1354, %v1341, %v1343
    %v1360 = vsel %vm1354, %v1351, %v1341
    %v1361 = vmax.f32 %v910, %v1359
    %v1362 = vmax.f32 %v912, %v1358
    %v1363 = vmax.f32 %v1123, %v1357
    %v1364 = vmax.f32 %v1125, %v1356
    %v1365 = vmax.f32 %v1336, %v1355
    %v1366 = vmax.f32 %v1338, %v1360
    %1367 = vrot.lane.b32.xlu0 %v910, 126
    %v1368 = vpop.permute.xlu0 %1367
    %1369 = vrot.lane.b32.xlu0 %v912, 126
    %v1370 = vpop.permute.xlu0 %1369
    %1371 = vrot.lane.b32.xlu0 %v1123, 126
    %v1372 = vpop.permute.xlu0 %1371
    %1373 = vrot.lane.b32.xlu0 %v1125, 126
    %v1374 = vpop.permute.xlu0 %1373
    %1375 = vrot.lane.b32.xlu0 %v1336, 126
    %v1376 = vpop.permute.xlu0 %1375
    %1377 = vrot.lane.b32.xlu0 %v1338, 126
    %v1378 = vpop.permute.xlu0 %1377
    %vm1379 = vcmp.lt.s32.totalorder %v1353, 126
    %v1380 = vsel %vm1379, %v1376, %v1378
    %v1381 = vsel %vm1379, %v1374, %v1376
    %v1382 = vsel %vm1379, %v1372, %v1374
    %v1383 = vsel %vm1379, %v1370, %v1372
    %v1384 = vsel %vm1379, %v1368, %v1370
    %v1385 = vsel %vm1379, %v1378, %v1368
    %v1386 = vmax.f32 %v1361, %v1384
    %v1387 = vmax.f32 %v1362, %v1383
    %v1388 = vmax.f32 %v1363, %v1382
    %v1389 = vmax.f32 %v1364, %v1381
    %v1390 = vmax.f32 %v1365, %v1380
    %v1391 = vmax.f32 %v1366, %v1385
    %1392 = vrot.lane.b32.xlu0 %v910, 112
    %v1393 = vpop.permute.xlu0 %1392
    %1394 = vrot.lane.b32.xlu0 %v912, 112
    %v1395 = vpop.permute.xlu0 %1394
    %1396 = vrot.lane.b32.xlu0 %v1123, 112
    %v1397 = vpop.permute.xlu0 %1396
    %1398 = vrot.lane.b32.xlu0 %v1125, 112
    %v1399 = vpop.permute.xlu0 %1398
    %1400 = vrot.lane.b32.xlu0 %v1336, 112
    %v1401 = vpop.permute.xlu0 %1400
    %1402 = vrot.lane.b32.xlu0 %v1338, 112
    %v1403 = vpop.permute.xlu0 %1402
    %vm1404 = vcmp.lt.s32.totalorder %v1353, 112
    %v1405 = vsel %vm1404, %v1401, %v1403
    %v1406 = vsel %vm1404, %v1399, %v1401
    %v1407 = vsel %vm1404, %v1397, %v1399
    %v1408 = vsel %vm1404, %v1395, %v1397
    %v1409 = vsel %vm1404, %v1393, %v1395
    %v1410 = vsel %vm1404, %v1403, %v1393
    %v1411 = vmax.f32 %v1386, %v1409
    %v1412 = vmax.f32 %v1387, %v1408
    %v1413 = vmax.f32 %v1388, %v1407
    %v1414 = vmax.f32 %v1389, %v1406
    %v1415 = vmax.f32 %v1390, %v1405
    %v1416 = vmax.f32 %v1391, %v1410
    %1417 = vrot.lane.b32.xlu0 %v910, 111
    %v1418 = vpop.permute.xlu0 %1417
    %1419 = vrot.lane.b32.xlu0 %v912, 111
    %v1420 = vpop.permute.xlu0 %1419
    %1421 = vrot.lane.b32.xlu0 %v1123, 111
    %v1422 = vpop.permute.xlu0 %1421
    %1423 = vrot.lane.b32.xlu0 %v1125, 111
    %v1424 = vpop.permute.xlu0 %1423
    %1425 = vrot.lane.b32.xlu0 %v1336, 111
    %v1426 = vpop.permute.xlu0 %1425
    %1427 = vrot.lane.b32.xlu0 %v1338, 111
    %v1428 = vpop.permute.xlu0 %1427
    %vm1429 = vcmp.lt.s32.totalorder %v1353, 111
    %v1430 = vsel %vm1429, %v1426, %v1428
    %v1431 = vsel %vm1429, %v1424, %v1426
    %v1432 = vsel %vm1429, %v1422, %v1424
    %v1433 = vsel %vm1429, %v1420, %v1422
    %v1434 = vsel %vm1429, %v1418, %v1420
    %v1435 = vsel %vm1429, %v1428, %v1418
    %v1436 = vmax.f32 %v1411, %v1434
    %v1437 = vmax.f32 %v1412, %v1433
    %v1438 = vmax.f32 %v1413, %v1432
    %v1439 = vmax.f32 %v1414, %v1431
    %v1440 = vmax.f32 %v1415, %v1430
    %v1441 = vmax.f32 %v1416, %v1435
    %1442 = vrot.lane.b32.xlu0 %v910, 110
    %v1443 = vpop.permute.xlu0 %1442
    %1444 = vrot.lane.b32.xlu0 %v912, 110
    %v1445 = vpop.permute.xlu0 %1444
    %1446 = vrot.lane.b32.xlu0 %v1123, 110
    %v1447 = vpop.permute.xlu0 %1446
    %1448 = vrot.lane.b32.xlu0 %v1125, 110
    %v1449 = vpop.permute.xlu0 %1448
    %1450 = vrot.lane.b32.xlu0 %v1336, 110
    %v1451 = vpop.permute.xlu0 %1450
    %1452 = vrot.lane.b32.xlu0 %v1338, 110
    %v1453 = vpop.permute.xlu0 %1452
    %vm1454 = vcmp.lt.s32.totalorder %v1353, 110
    %v1455 = vsel %vm1454, %v1451, %v1453
    %v1456 = vsel %vm1454, %v1449, %v1451
    %v1457 = vsel %vm1454, %v1447, %v1449
    %v1458 = vsel %vm1454, %v1445, %v1447
    %v1459 = vsel %vm1454, %v1443, %v1445
    %v1460 = vsel %vm1454, %v1453, %v1443
    %v1461 = vmax.f32 %v1436, %v1459
    %v1462 = vmax.f32 %v1437, %v1458
    %v1463 = vmax.f32 %v1438, %v1457
    %v1464 = vmax.f32 %v1439, %v1456
    %v1465 = vmax.f32 %v1440, %v1455
    %v1466 = vmax.f32 %v1441, %v1460
    %1467 = vrot.lane.b32.xlu0 %v910, 96
    %v1468 = vpop.permute.xlu0 %1467
    %1469 = vrot.lane.b32.xlu0 %v912, 96
    %v1470 = vpop.permute.xlu0 %1469
    %1471 = vrot.lane.b32.xlu0 %v1123, 96
    %v1472 = vpop.permute.xlu0 %1471
    %1473 = vrot.lane.b32.xlu0 %v1125, 96
    %v1474 = vpop.permute.xlu0 %1473
    %1475 = vrot.lane.b32.xlu0 %v1336, 96
    %v1476 = vpop.permute.xlu0 %1475
    %1477 = vrot.lane.b32.xlu0 %v1338, 96
    %v1478 = vpop.permute.xlu0 %1477
    %vm1479 = vcmp.lt.s32.totalorder %v1353, 96
    %v1480 = vsel %vm1479, %v1476, %v1478
    %v1481 = vsel %vm1479, %v1474, %v1476
    %v1482 = vsel %vm1479, %v1472, %v1474
    %v1483 = vsel %vm1479, %v1470, %v1472
    %v1484 = vsel %vm1479, %v1468, %v1470
    %v1485 = vsel %vm1479, %v1478, %v1468
    %v1486 = vmax.f32 %v1461, %v1484
    %v1487 = vmax.f32 %v1462, %v1483
    %v1488 = vmax.f32 %v1463, %v1482
    %v1489 = vmax.f32 %v1464, %v1481
    %v1490 = vmax.f32 %v1465, %v1480
    %v1491 = vmax.f32 %v1466, %v1485
    %1492 = vrot.lane.b32.xlu0 %v910, 95
    %v1493 = vpop.permute.xlu0 %1492
    %1494 = vrot.lane.b32.xlu0 %v912, 95
    %v1495 = vpop.permute.xlu0 %1494
    %1496 = vrot.lane.b32.xlu0 %v1123, 95
    %v1497 = vpop.permute.xlu0 %1496
    %1498 = vrot.lane.b32.xlu0 %v1125, 95
    %v1499 = vpop.permute.xlu0 %1498
    %1500 = vrot.lane.b32.xlu0 %v1336, 95
    %v1501 = vpop.permute.xlu0 %1500
    %1502 = vrot.lane.b32.xlu0 %v1338, 95
    %v1503 = vpop.permute.xlu0 %1502
    %vm1504 = vcmp.lt.s32.totalorder %v1353, 95
    %v1505 = vsel %vm1504, %v1501, %v1503
    %v1506 = vsel %vm1504, %v1499, %v1501
    %v1507 = vsel %vm1504, %v1497, %v1499
    %v1508 = vsel %vm1504, %v1495, %v1497
    %v1509 = vsel %vm1504, %v1493, %v1495
    %v1510 = vsel %vm1504, %v1503, %v1493
    %v1511 = vmax.f32 %v1486, %v1509
    %v1512 = vmax.f32 %v1487, %v1508
    %v1513 = vmax.f32 %v1488, %v1507
    %v1514 = vmax.f32 %v1489, %v1506
    %v1515 = vmax.f32 %v1490, %v1505
    %v1516 = vmax.f32 %v1491, %v1510
    %1517 = vrot.lane.b32.xlu0 %v910, 94
    %v1518 = vpop.permute.xlu0 %1517
    %1519 = vrot.lane.b32.xlu0 %v912, 94
    %v1520 = vpop.permute.xlu0 %1519
    %1521 = vrot.lane.b32.xlu0 %v1123, 94
    %v1522 = vpop.permute.xlu0 %1521
    %1523 = vrot.lane.b32.xlu0 %v1125, 94
    %v1524 = vpop.permute.xlu0 %1523
    %1525 = vrot.lane.b32.xlu0 %v1336, 94
    %v1526 = vpop.permute.xlu0 %1525
    %1527 = vrot.lane.b32.xlu0 %v1338, 94
    %v1528 = vpop.permute.xlu0 %1527
    %vm1529 = vcmp.lt.s32.totalorder %v1353, 94
    %v1530 = vsel %vm1529, %v1526, %v1528
    %v1531 = vsel %vm1529, %v1524, %v1526
    %v1532 = vsel %vm1529, %v1522, %v1524
    %v1533 = vsel %vm1529, %v1520, %v1522
    %v1534 = vsel %vm1529, %v1518, %v1520
    %v1535 = vsel %vm1529, %v1528, %v1518
    %v1536 = vmax.f32 %v1511, %v1534
    %v1537 = vmax.f32 %v1512, %v1533
    %v1538 = vmax.f32 %v1513, %v1532
    %v1539 = vmax.f32 %v1514, %v1531
    %v1540 = vmax.f32 %v1515, %v1530
    %v1541 = vmax.f32 %v1516, %v1535
    %v1542 = vmax.f32 %v1536, 0.0
    %v1543 = vmax.f32 %v1537, 0.0
    %v1544 = vmax.f32 %v1538, 0.0
    %v1545 = vmax.f32 %v1539, 0.0
    %v1546 = vmax.f32 %v1540, 0.0
    %v1547 = vmax.f32 %v1541, 0.0
    %v1548 = vld [vmem:[%s3] sm:$0xff]
    %v1549 = vld [vmem:[%s3 + $0x8] sm:$0xff]
    %v1550 = vld [vmem:[%s3 + $0x10] sm:$0xff]
    %v1551 = vld [vmem:[%s3 + $0x18] sm:$0xff]
    %v1552 = vld [vmem:[%s3 + $0x20] sm:$0xff]
    %v1553 = vld [vmem:[%s3 + $0x28] sm:$0xff]
    %v1554 = vld [vmem:[%s3 + $0x30] sm:$0xff]
    %v1555 = vld [vmem:[%s3 + $0x38] sm:$0xff]
    %v1556 = vld [vmem:[%s3 + $0x40] sm:$0xff]
    %v1557 = vld [vmem:[%s3 + $0x48] sm:$0xff]
    %v1558 = vld [vmem:[%s3 + $0x50] sm:$0xff]
    %v1559 = vld [vmem:[%s3 + $0x58] sm:$0xff]
    %v1560 = vld [vmem:[%s3 + $0x60] sm:$0xff]
    %v1561 = vld [vmem:[%s3 + $0x68] sm:$0xff]
    %v1562 = vld [vmem:[%s3 + $0x70] sm:$0xff]
    %v1563 = vld [vmem:[%s3 + $0x78] sm:$0xff]
    %v1564 = vld [vmem:[%s3 + $0x80] sm:$0xff]
    %v1565 = vld [vmem:[%s3 + $0x88] sm:$0xff]
    %v1566 = vld [vmem:[%s3 + $0x90] sm:$0xff]
    %v1567 = vld [vmem:[%s3 + $0x98] sm:$0xff]
    %v1568 = vld [vmem:[%s3 + $0xa0] sm:$0xff]
    %v1569 = vld [vmem:[%s3 + $0xa8] sm:$0xff]
    %v1570 = vld [vmem:[%s3 + $0xb0] sm:$0xff]
    %v1571 = vld [vmem:[%s3 + $0xb8] sm:$0xff]
    %v1572 = vld [vmem:[%s3 + $0xc0] sm:$0xff]
    %v1573 = vld [vmem:[%s3 + $0xc8] sm:$0xff]
    %v1574 = vld [vmem:[%s3 + $0xd0] sm:$0xff]
    %v1575 = vld [vmem:[%s3 + $0xd8] sm:$0xff]
    %v1576 = vld [vmem:[%s3 + $0xe0] sm:$0xff]
    %v1577 = vld [vmem:[%s3 + $0xe8] sm:$0xff]
    %v1578 = vld [vmem:[%s3 + $0xf0] sm:$0xff]
    %v1579 = vld [vmem:[%s3 + $0xf8] sm:$0xff]
    %v1580 = vld [vmem:[%s3 + $0x100] sm:$0xff]
    %v1581 = vld [vmem:[%s3 + $0x108] sm:$0xff]
    %v1582 = vld [vmem:[%s3 + $0x110] sm:$0xff]
    %v1583 = vld [vmem:[%s3 + $0x118] sm:$0xff]
    %v1584 = vld [vmem:[%s3 + $0x120] sm:$0xff]
    %v1585 = vld [vmem:[%s3 + $0x128] sm:$0xff]
    %v1586 = vld [vmem:[%s3 + $0x130] sm:$0xff]
    %v1587 = vld [vmem:[%s3 + $0x138] sm:$0xff]
    %v1588 = vld [vmem:[%s3 + $0x140] sm:$0xff]
    %v1589 = vld [vmem:[%s3 + $0x148] sm:$0xff]
    %v1590 = vld [vmem:[%s3 + $0x150] sm:$0xff]
    %v1591 = vld [vmem:[%s3 + $0x158] sm:$0xff]
    %v1592 = vld [vmem:[%s3 + $0x160] sm:$0xff]
    %v1593 = vld [vmem:[%s3 + $0x168] sm:$0xff]
    %v1594 = vld [vmem:[%s3 + $0x170] sm:$0xff]
    %v1595 = vld [vmem:[%s3 + $0x178] sm:$0xff]
    %v1596 = vld [vmem:[%s3 + $0x180] sm:$0xff]
    %v1597 = vld [vmem:[%s3 + $0x188] sm:$0xff]
    %v1598 = vld [vmem:[%s3 + $0x190] sm:$0xff]
    %v1599 = vld [vmem:[%s3 + $0x198] sm:$0xff]
    %v1600 = vld [vmem:[%s3 + $0x1a0] sm:$0xff]
    %v1601 = vld [vmem:[%s3 + $0x1a8] sm:$0xff]
    %v1602 = vld [vmem:[%s3 + $0x1b0] sm:$0xff]
    %v1603 = vld [vmem:[%s3 + $0x1b8] sm:$0xff]
    %v1604 = vld [vmem:[%s3 + $0x1c0] sm:$0xff]
    %v1605 = vld [vmem:[%s3 + $0x1c8] sm:$0xff]
    %v1606 = vld [vmem:[%s3 + $0x1d0] sm:$0xff]
    %v1607 = vld [vmem:[%s3 + $0x1d8] sm:$0xff]
    %v1608 = vld [vmem:[%s3 + $0x1e0] sm:$0xff]
    %v1609 = vld [vmem:[%s3 + $0x1e8] sm:$0xff]
    %v1610 = vld [vmem:[%s3 + $0x1f0] sm:$0xff]
    %v1611 = vld [vmem:[%s3 + $0x1f8] sm:$0xff]
    %v1612 = vld [vmem:[%s3 + $0x200] sm:$0xff]
    %v1613 = vld [vmem:[%s3 + $0x208] sm:$0xff]
    %v1614 = vld [vmem:[%s3 + $0x210] sm:$0xff]
    %v1615 = vld [vmem:[%s3 + $0x218] sm:$0xff]
    %v1616 = vld [vmem:[%s3 + $0x220] sm:$0xff]
    %v1617 = vld [vmem:[%s3 + $0x228] sm:$0xff]
    %v1618 = vld [vmem:[%s3 + $0x230] sm:$0xff]
    %v1619 = vld [vmem:[%s3 + $0x238] sm:$0xff]
    %v1620 = vld [vmem:[%s3 + $0x240] sm:$0xff]
    %v1621 = vld [vmem:[%s3 + $0x248] sm:$0xff]
    %v1622 = vld [vmem:[%s3 + $0x250] sm:$0xff]
    %v1623 = vld [vmem:[%s3 + $0x258] sm:$0xff]
    %v1624 = vld [vmem:[%s3 + $0x260] sm:$0xff]
    %v1625 = vld [vmem:[%s3 + $0x268] sm:$0xff]
    %v1626 = vld [vmem:[%s3 + $0x270] sm:$0xff]
    %v1627 = vld [vmem:[%s3 + $0x278] sm:$0xff]
    %v1628 = vld [vmem:[%s3 + $0x280] sm:$0xff]
    %v1629 = vld [vmem:[%s3 + $0x288] sm:$0xff]
    %v1630 = vld [vmem:[%s3 + $0x290] sm:$0xff]
    %v1631 = vld [vmem:[%s3 + $0x298] sm:$0xff]
    %v1632 = vld [vmem:[%s3 + $0x2a0] sm:$0xff]
    %v1633 = vld [vmem:[%s3 + $0x2a8] sm:$0xff]
    %v1634 = vld [vmem:[%s3 + $0x2b0] sm:$0xff]
    %v1635 = vld [vmem:[%s3 + $0x2b8] sm:$0xff]
    %v1636 = vld [vmem:[%s3 + $0x2c0] sm:$0xff]
    %v1637 = vld [vmem:[%s3 + $0x2c8] sm:$0xff]
    %v1638 = vld [vmem:[%s3 + $0x2d0] sm:$0xff]
    %v1639 = vld [vmem:[%s3 + $0x2d8] sm:$0xff]
    %v1640 = vld [vmem:[%s3 + $0x2e0] sm:$0xff]
    %v1641 = vld [vmem:[%s3 + $0x2e8] sm:$0xff]
    %v1642 = vld [vmem:[%s3 + $0x2f0] sm:$0xff]
    %v1643 = vld [vmem:[%s3 + $0x2f8] sm:$0xff]
    %v1644 = vld [vmem:[#allocation7] sm:$0x1]
    %v1646 = vlaneseq
    %v1647 = vshrl.u32 %v1646, 7
    %v1648 = vsub.s32 0, %v1647
    %v1649 = vrot.slane %v1644, %v1648
    %1651 = vmatprep.subr.mxu0 0.0
    %1652 = vmatpush1.msra.mxu0 %v1548
    %1653 = vmatprep.subr.mxu0 0.0
    %1654 = vmatpush1.msra.mxu0 %v1549
    %1655 = vmatprep.subr.mxu0 0.0
    %1656 = vmatpush1.msra.mxu0 %v1550
    %1657 = vmatprep.subr.mxu0 0.0
    %1658 = vmatpush1.msra.mxu0 %v1551
    %1659 = vmatprep.subr.mxu0 0.0
    %1660 = vmatpush1.msra.mxu0 %v1552
    %1661 = vmatprep.subr.mxu0 0.0
    %1662 = vmatpush1.msra.mxu0 %v1553
    %1663 = vmatprep.subr.mxu0 0.0
    %1664 = vmatpush1.msra.mxu0 %v1554
    %1665 = vmatprep.subr.mxu0 0.0
    %1666 = vmatpush1.msra.mxu0 %v1555
    %1667 = vmatprep.subr.mxu0 0.0
    %1668 = vmatpush1.msra.mxu0 %v1556
    %1669 = vmatprep.subr.mxu0 0.0
    %1670 = vmatpush1.msra.mxu0 %v1557
    %1671 = vmatprep.subr.mxu0 0.0
    %1672 = vmatpush1.msra.mxu0 %v1558
    %1673 = vmatprep.subr.mxu0 0.0
    %1674 = vmatpush1.msra.mxu0 %v1559
    %1675 = vmatprep.subr.mxu0 0.0
    %1676 = vmatpush1.msra.mxu0 %v1560
    %1677 = vmatprep.subr.mxu0 0.0
    %1678 = vmatpush1.msra.mxu0 %v1561
    %1679 = vmatprep.subr.mxu0 0.0
    %1680 = vmatpush1.msra.mxu0 %v1562
    %1681 = vmatprep.subr.mxu0 0.0
    %1682 = vmatpush1.msra.mxu0 %v1563
    %1683 = vmatprep.subr.mxu0 0.0
    %1684 = vmatpush1.msra.mxu0 %v1564
    %1685 = vmatprep.subr.mxu0 0.0
    %1686 = vmatpush1.msra.mxu0 %v1565
    %1687 = vmatprep.subr.mxu0 0.0
    %1688 = vmatpush1.msra.mxu0 %v1566
    %1689 = vmatprep.subr.mxu0 0.0
    %1690 = vmatpush1.msra.mxu0 %v1567
    %1691 = vmatprep.subr.mxu0 0.0
    %1692 = vmatpush1.msra.mxu0 %v1568
    %1693 = vmatprep.subr.mxu0 0.0
    %1694 = vmatpush1.msra.mxu0 %v1569
    %1695 = vmatprep.subr.mxu0 0.0
    %1696 = vmatpush1.msra.mxu0 %v1570
    %1697 = vmatprep.subr.mxu0 0.0
    %1698 = vmatpush1.msra.mxu0 %v1571
    %1699 = vmatprep.subr.mxu0 0.0
    %1700 = vmatpush1.msra.mxu0 %v1572
    %1701 = vmatprep.subr.mxu0 0.0
    %1702 = vmatpush1.msra.mxu0 %v1573
    %1703 = vmatprep.subr.mxu0 0.0
    %1704 = vmatpush1.msra.mxu0 %v1574
    %1705 = vmatprep.subr.mxu0 0.0
    %1706 = vmatpush1.msra.mxu0 %v1575
    %1707 = vmatprep.subr.mxu0 0.0
    %1708 = vmatpush1.msra.mxu0 %v1576
    %1709 = vmatprep.subr.mxu0 0.0
    %1710 = vmatpush1.msra.mxu0 %v1577
    %1711 = vmatprep.subr.mxu0 0.0
    %1712 = vmatpush1.msra.mxu0 %v1578
    %1713 = vmatprep.subr.mxu0 0.0
    %1714 = vmatpush1.msra.mxu0 %v1579
    %1715 = vmatprep.mubr.f32.mxu0 %v1543
    %1716 = vmatmul.mubr.f32.gmra.mrb[0].mxu0 %v1542
    %v1717 = vpop.f32.mrb[0].mxu0
    %v1718 = vadd.f32 %v1649, %v1717
    %v1719 = vpop.f32.mrb[0].mxu0
    %1720 = vdwg.mxu0
    %1721 = vmatprep.subr.mxu0 0.0
    %1722 = vmatpush1.msra.mxu0 %v1580
    %1723 = vmatprep.subr.mxu0 0.0
    %1724 = vmatpush1.msra.mxu0 %v1581
    %1725 = vmatprep.subr.mxu0 0.0
    %1726 = vmatpush1.msra.mxu0 %v1582
    %1727 = vmatprep.subr.mxu0 0.0
    %1728 = vmatpush1.msra.mxu0 %v1583
    %1729 = vmatprep.subr.mxu0 0.0
    %1730 = vmatpush1.msra.mxu0 %v1584
    %1731 = vmatprep.subr.mxu0 0.0
    %1732 = vmatpush1.msra.mxu0 %v1585
    %1733 = vmatprep.subr.mxu0 0.0
    %1734 = vmatpush1.msra.mxu0 %v1586
    %1735 = vmatprep.subr.mxu0 0.0
    %1736 = vmatpush1.msra.mxu0 %v1587
    %1737 = vmatprep.subr.mxu0 0.0
    %1738 = vmatpush1.msra.mxu0 %v1588
    %1739 = vmatprep.subr.mxu0 0.0
    %1740 = vmatpush1.msra.mxu0 %v1589
    %1741 = vmatprep.subr.mxu0 0.0
    %1742 = vmatpush1.msra.mxu0 %v1590
    %1743 = vmatprep.subr.mxu0 0.0
    %1744 = vmatpush1.msra.mxu0 %v1591
    %1745 = vmatprep.subr.mxu0 0.0
    %1746 = vmatpush1.msra.mxu0 %v1592
    %1747 = vmatprep.subr.mxu0 0.0
    %1748 = vmatpush1.msra.mxu0 %v1593
    %1749 = vmatprep.subr.mxu0 0.0
    %1750 = vmatpush1.msra.mxu0 %v1594
    %1751 = vmatprep.subr.mxu0 0.0
    %1752 = vmatpush1.msra.mxu0 %v1595
    %1753 = vmatprep.subr.mxu0 0.0
    %1754 = vmatpush1.msra.mxu0 %v1596
    %1755 = vmatprep.subr.mxu0 0.0
    %1756 = vmatpush1.msra.mxu0 %v1597
    %1757 = vmatprep.subr.mxu0 0.0
    %1758 = vmatpush1.msra.mxu0 %v1598
    %1759 = vmatprep.subr.mxu0 0.0
    %1760 = vmatpush1.msra.mxu0 %v1599
    %1761 = vmatprep.subr.mxu0 0.0
    %1762 = vmatpush1.msra.mxu0 %v1600
    %1763 = vmatprep.subr.mxu0 0.0
    %1764 = vmatpush1.msra.mxu0 %v1601
    %1765 = vmatprep.subr.mxu0 0.0
    %1766 = vmatpush1.msra.mxu0 %v1602
    %1767 = vmatprep.subr.mxu0 0.0
    %1768 = vmatpush1.msra.mxu0 %v1603
    %1769 = vmatprep.subr.mxu0 0.0
    %1770 = vmatpush1.msra.mxu0 %v1604
    %1771 = vmatprep.subr.mxu0 0.0
    %1772 = vmatpush1.msra.mxu0 %v1605
    %1773 = vmatprep.subr.mxu0 0.0
    %1774 = vmatpush1.msra.mxu0 %v1606
    %1775 = vmatprep.subr.mxu0 0.0
    %1776 = vmatpush1.msra.mxu0 %v1607
    %1777 = vmatprep.subr.mxu0 0.0
    %1778 = vmatpush1.msra.mxu0 %v1608
    %1779 = vmatprep.subr.mxu0 0.0
    %1780 = vmatpush1.msra.mxu0 %v1609
    %1781 = vmatprep.subr.mxu0 0.0
    %1782 = vmatpush1.msra.mxu0 %v1610
    %1783 = vmatprep.subr.mxu0 0.0
    %1784 = vmatpush1.msra.mxu0 %v1611
    %1785 = vmatprep.mubr.f32.mxu0 %v1545
    %1786 = vmatmul.mubr.f32.gmra.mrb[0].mxu0 %v1544
    %v1787 = vpop.f32.mrb[0].mxu0
    %v1788 = vadd.f32 %v1718, %v1787
    %v1789 = vpop.f32.mrb[0].mxu0
    %1790 = vdwg.mxu0
    %1791 = vmatprep.subr.mxu0 0.0
    %1792 = vmatpush1.msra.mxu0 %v1612
    %1793 = vmatprep.subr.mxu0 0.0
    %1794 = vmatpush1.msra.mxu0 %v1613
    %1795 = vmatprep.subr.mxu0 0.0
    %1796 = vmatpush1.msra.mxu0 %v1614
    %1797 = vmatprep.subr.mxu0 0.0
    %1798 = vmatpush1.msra.mxu0 %v1615
    %1799 = vmatprep.subr.mxu0 0.0
    %1800 = vmatpush1.msra.mxu0 %v1616
    %1801 = vmatprep.subr.mxu0 0.0
    %1802 = vmatpush1.msra.mxu0 %v1617
    %1803 = vmatprep.subr.mxu0 0.0
    %1804 = vmatpush1.msra.mxu0 %v1618
    %1805 = vmatprep.subr.mxu0 0.0
    %1806 = vmatpush1.msra.mxu0 %v1619
    %1807 = vmatprep.subr.mxu0 0.0
    %1808 = vmatpush1.msra.mxu0 %v1620
    %1809 = vmatprep.subr.mxu0 0.0
    %1810 = vmatpush1.msra.mxu0 %v1621
    %1811 = vmatprep.subr.mxu0 0.0
    %1812 = vmatpush1.msra.mxu0 %v1622
    %1813 = vmatprep.subr.mxu0 0.0
    %1814 = vmatpush1.msra.mxu0 %v1623
    %1815 = vmatprep.subr.mxu0 0.0
    %1816 = vmatpush1.msra.mxu0 %v1624
    %1817 = vmatprep.subr.mxu0 0.0
    %1818 = vmatpush1.msra.mxu0 %v1625
    %1819 = vmatprep.subr.mxu0 0.0
    %1820 = vmatpush1.msra.mxu0 %v1626
    %1821 = vmatprep.subr.mxu0 0.0
    %1822 = vmatpush1.msra.mxu0 %v1627
    %1823 = vmatprep.subr.mxu0 0.0
    %1824 = vmatpush1.msra.mxu0 %v1628
    %1825 = vmatprep.subr.mxu0 0.0
    %1826 = vmatpush1.msra.mxu0 %v1629
    %1827 = vmatprep.subr.mxu0 0.0
    %1828 = vmatpush1.msra.mxu0 %v1630
    %1829 = vmatprep.subr.mxu0 0.0
    %1830 = vmatpush1.msra.mxu0 %v1631
    %1831 = vmatprep.subr.mxu0 0.0
    %1832 = vmatpush1.msra.mxu0 %v1632
    %1833 = vmatprep.subr.mxu0 0.0
    %1834 = vmatpush1.msra.mxu0 %v1633
    %1835 = vmatprep.subr.mxu0 0.0
    %1836 = vmatpush1.msra.mxu0 %v1634
    %1837 = vmatprep.subr.mxu0 0.0
    %1838 = vmatpush1.msra.mxu0 %v1635
    %1839 = vmatprep.subr.mxu0 0.0
    %1840 = vmatpush1.msra.mxu0 %v1636
    %1841 = vmatprep.subr.mxu0 0.0
    %1842 = vmatpush1.msra.mxu0 %v1637
    %1843 = vmatprep.subr.mxu0 0.0
    %1844 = vmatpush1.msra.mxu0 %v1638
    %1845 = vmatprep.subr.mxu0 0.0
    %1846 = vmatpush1.msra.mxu0 %v1639
    %1847 = vmatprep.subr.mxu0 0.0
    %1848 = vmatpush1.msra.mxu0 %v1640
    %1849 = vmatprep.subr.mxu0 0.0
    %1850 = vmatpush1.msra.mxu0 %v1641
    %1851 = vmatprep.subr.mxu0 0.0
    %1852 = vmatpush1.msra.mxu0 %v1642
    %1853 = vmatprep.subr.mxu0 0.0
    %1854 = vmatpush1.msra.mxu0 %v1643
    %1855 = vmatprep.mubr.f32.mxu0 %v1547
    %1856 = vmatmul.mubr.f32.gmra.mrb[0].mxu0 %v1546
    %v1857 = vpop.f32.mrb[0].mxu0
    %v1858 = vadd.f32 %v1788, %v1857
    %v1859 = vpop.f32.mrb[0].mxu0
    %1860 = vdwg.mxu0
    %vm1861 = vcmask 517120
    %1862 = vst.msk [vmem:[#allocation8] sm:$0x3] %vm1861, %v1858
    // Predicated region
    $region34: #{rnn_module_forward.1} parent=1 // pred_check
      _
    $region35: #{rnn_module_forward.1} parent=1 // pred_check_branch
      %1864 = sbr.rel (0) target = $region37
    $region36: #{rnn_module_forward.1} parent=1 // pred_region
      %s1866 = ssub.s32 32, 32
      %1867 = vsyncadd [#allocation4], %s1866
      %s1869 = sshll.u32 [#allocation8], 4
      %s1870 = int_to_ptr.vmem [resolvable:$true] %s1869
      %1872 = dma.vmem_to_hbm [thread:$0]  %s1870, 32, %s5, [#allocation4]
    $region37: #{rnn_module_forward.1} parent=1 // pred_fallthru
      _
    // Predicated region
    $region38: #{rnn_module_forward.1} parent=1 // pred_check
      _
    $region39: #{rnn_module_forward.1} parent=1 // pred_check_branch
      %1874 = sbr.rel (0) target = $region41
    $region40: #{rnn_module_forward.1} parent=1 // pred_region
      %1875 = dma.done [#allocation4], 32
    $region41: #{rnn_module_forward.1} parent=1 // pred_fallthru
      _
    %1876 = vsyncpa [#allocation3], 1
    %1877 = vsyncpa [#allocation6], 1
    %1878 = vsyncpa [#allocation4], 1

</llo_original>
